<compile_context>
chip_gen: v7x
topology: tpu7x:2x2x1
jax: 0.10.0
libtpu: 0.0.40
codegen_flags: <defaults>
</compile_context>

<pallas_src>
import math

import jax
import jax.numpy as jnp
from jax.experimental import pallas as pl
from jax.experimental.pallas import tpu as pltpu


def timestep_embedder_kernel(args_ref, w1_ref, b1_ref, w2_ref, b2_ref,
                             o_ref, h_ref):
    """One (batch tile, output-column tile) of the TimestepEmbedder forward.

    args_ref: (tm, half)      f32 precomputed t[:,None] * freqs
    w1_ref:   (2*half, H)     first linear weight (rows: [cos-half ; sin-half])
    b1_ref:   (1, H)          f32
    w2_ref:   (H, tn)         second linear weight, column tile j
    b2_ref:   (1, tn)         f32
    o_ref:    (tm, tn)        output tile
    h_ref:    (tm, H) f32     VMEM scratch, persists across the column axis
    """
    j = pl.program_id(1)

    # First linear + SiLU computed once per batch tile, reused for every w2
    # column tile.
    @pl.when(j == 0)
    def _compute_hidden():
        args = args_ref[...]                                     # (tm, half) f32
        # emb = [cos | sin] built contiguously on the lane axis -> one
        # K = 2*half matmul (free lane-aligned relayout when half % 128 == 0).
        emb = jnp.concatenate([jnp.cos(args), jnp.sin(args)], axis=-1)
        emb = emb.astype(w1_ref.dtype)                           # bf16 MXU input
        h = (jnp.dot(emb, w1_ref[...], preferred_element_type=jnp.float32)
             + b1_ref[...])
        h_ref[...] = h * jax.nn.sigmoid(h)                       # SiLU in f32

    # Second linear: streamed w2 column tile.
    out = (jnp.dot(h_ref[...].astype(w2_ref.dtype), w2_ref[...],
                   preferred_element_type=jnp.float32)
           + b2_ref[...])
    o_ref[...] = out.astype(o_ref.dtype)


def _round_up(x, m):
    return ((x + m - 1) // m) * m


def _pick_tn(hidden):
    """Largest lane-aligned column tile that divides hidden."""
    for cand in (512, 384, 256, 128):
        if hidden % cand == 0:
            return cand
    return hidden  # small / irregular hidden: single column tile


def cast_params(params, compute_dtype):
    """Pre-cast weights ONCE (outside the per-call path) for the bf16 MXU
    path; avoids re-streaming f32 weights through an XLA cast every call."""
    return {
        "w1": params["w1"].astype(compute_dtype),
        "w2": params["w2"].astype(compute_dtype),
        "b1": params["b1"].astype(jnp.float32),
        "b2": params["b2"].astype(jnp.float32),
    }


def timestep_embedder(t, params, *, frequency_embedding_size=256,
                      max_period=10000, tm=None, tn=None,
                      compute_dtype=jnp.bfloat16, out_dtype=jnp.float32):
    """t: (N,) float timesteps.  Returns (N, hidden_size) embeddings.

    compute_dtype: dtype fed to the MXU (weights + activations); accumulation
    is always f32.  bf16 halves the dominant weight-DMA bytes (the kernel is
    weight-bandwidth bound at these sizes, not MXU bound).
    """
    assert frequency_embedding_size % 2 == 0, \
        "odd frequency_embedding_size (extra zero column) not implemented"
    # TODO(synk): dim % 2 == 1 zero-pad column path not implemented; the module
    # default dim=256 is even.

    w1, b1, w2, b2 = params["w1"], params["b1"], params["w2"], params["b2"]
    half = frequency_embedding_size // 2
    hidden = w1.shape[1]
    N = t.shape[0]

    # Batch tile: small batches run as a single grid step; large batches use
    # MXU-sized 256-row tiles. Column tile over the output hidden dim.
    if tm is None:
        tm = min(256, _round_up(max(N, 8), 8))
    assert tm % 8 == 0, "tm must be a multiple of the 8-row sublane tile"
    if tn is None:
        tn = _pick_tn(hidden)
    assert hidden % tn == 0, "tn must divide hidden"

    n_pad = _round_up(N, tm)
    grid_m = n_pad // tm
    grid_n = hidden // tn

    # Precompute lane-dense args = t[:,None] * freqs in the wrapper (tiny HBM
    # traffic vs weights); cos/sin stays in-kernel on the EUP.
    freqs = jnp.exp(-math.log(max_period)
                    * jnp.arange(half, dtype=jnp.float32) / half)
    args = t.astype(jnp.float32)[:, None] * freqs[None, :]        # (N, half)
    if n_pad != N:
        args = jnp.pad(args, ((0, n_pad - N), (0, 0)))

    # Cast only if not already pre-cast (cast_params): no-op otherwise.
    w1c = w1 if w1.dtype == compute_dtype else w1.astype(compute_dtype)
    w2c = w2 if w2.dtype == compute_dtype else w2.astype(compute_dtype)
    b1r = b1.reshape(1, hidden).astype(jnp.float32)
    b2r = b2.reshape(1, hidden).astype(jnp.float32)

    itemsize_w = jnp.dtype(compute_dtype).itemsize
    itemsize_o = jnp.dtype(out_dtype).itemsize

    # VMEM budget: single-buffered w1/b1 + double-buffered streaming w2/b2
    # column tiles + args/out tiles + h scratch, with slack. Cap at 64 MiB so
    # the same limit is valid on v7x.
    est_vmem = (2 * tm * half * 4                                  # args
                + frequency_embedding_size * hidden * itemsize_w   # w1
                + hidden * 4                                       # b1
                + 2 * (hidden * tn * itemsize_w + tn * 4)          # w2, b2
                + 2 * tm * tn * itemsize_o                         # out
                + tm * hidden * 4)                                 # h scratch
    vmem_limit = int(min(max(2 * est_vmem + (4 << 20), 32 << 20), 64 << 20))

    cost = pl.CostEstimate(
        flops=2 * n_pad * (frequency_embedding_size * hidden + hidden * hidden),
        transcendentals=n_pad * (frequency_embedding_size + hidden),
        bytes_accessed=(n_pad * half * 4
                        + (frequency_embedding_size * hidden
                           + hidden * hidden) * itemsize_w
                        + 2 * hidden * 4
                        + n_pad * hidden * itemsize_o),
    )

    # Megacore: shard the batch axis across TCs only when re-DMAing the
    # weights per core is amortized by enough batch rows.
    batch_sem = "parallel" if (grid_m > 1 and n_pad >= hidden) else "arbitrary"

    def build(single_buffer_weights):
        def resident(shape, index_map):
            # Constant index map -> DMA'd once; Buffered(1) drops the wasted
            # second pipeline buffer of the biggest residents.
            if single_buffer_weights:
                return pl.BlockSpec(shape, index_map,
                                    pipeline_mode=pl.Buffered(1))
            return pl.BlockSpec(shape, index_map)

        grid_spec = pltpu.PrefetchScalarGridSpec(
            num_scalar_prefetch=0,
            grid=(grid_m, grid_n),
            in_specs=[
                pl.BlockSpec((tm, half), lambda i, j: (i, 0)),            # args
                resident((frequency_embedding_size, hidden),
                         lambda i, j: (0, 0)),                            # w1
                resident((1, hidden), lambda i, j: (0, 0)),               # b1
                pl.BlockSpec((hidden, tn), lambda i, j: (0, j)),          # w2 col
                pl.BlockSpec((1, tn), lambda i, j: (0, j)),               # b2 col
            ],
            out_specs=pl.BlockSpec((tm, tn), lambda i, j: (i, j)),
            scratch_shapes=[pltpu.VMEM((tm, hidden), jnp.float32)],       # h
        )
        return pl.pallas_call(
            timestep_embedder_kernel,
            out_shape=jax.ShapeDtypeStruct((n_pad, hidden), out_dtype),
            grid_spec=grid_spec,
            compiler_params=pltpu.CompilerParams(
                dimension_semantics=(batch_sem, "arbitrary"),
                vmem_limit_bytes=vmem_limit),
            cost_estimate=cost,
        )(args, w1c, b1r, w2c, b2r)

    want_single = hasattr(pl, "Buffered")
    try:
        out = build(want_single)
    except Exception:
        if not want_single:
            raise
        out = build(False)   # fallback: default double-buffered weight specs

    return out[:N]


def reference_timestep_embedder(t, params, *, frequency_embedding_size=256,
                                max_period=10000):
    half = frequency_embedding_size // 2
    freqs = jnp.exp(-math.log(max_period)
                    * jnp.arange(half, dtype=jnp.float32) / half)
    args = t.astype(jnp.float32)[:, None] * freqs[None, :]
    emb = jnp.concatenate([jnp.cos(args), jnp.sin(args)], axis=-1)
    h = emb @ params["w1"] + params["b1"]
    h = h * jax.nn.sigmoid(h)
    return h @ params["w2"] + params["b2"]


def init_params(key, hidden_size, frequency_embedding_size=256):
    k1, k2, k3, k4 = jax.random.split(key, 4)
    s1 = 1.0 / math.sqrt(frequency_embedding_size)
    s2 = 1.0 / math.sqrt(hidden_size)
    return {
        # stored as (in_features, out_features) == PyTorch weight.T
        "w1": jax.random.uniform(k1, (frequency_embedding_size, hidden_size),
                                 jnp.float32, -s1, s1),
        "b1": jax.random.uniform(k2, (hidden_size,), jnp.float32, -s1, s1),
        "w2": jax.random.uniform(k3, (hidden_size, hidden_size),
                                 jnp.float32, -s2, s2),
        "b2": jax.random.uniform(k4, (hidden_size,), jnp.float32, -s2, s2),
    }


if __name__ == "__main__":
    hidden_size = 128
    freq_dim = 256

    key = jax.random.PRNGKey(0)
    kp, kt = jax.random.split(key)
    params = init_params(kp, hidden_size, freq_dim)
    # Pre-cast once (perf: avoids re-streaming f32 weights every call).
    params_bf16 = cast_params(params, jnp.bfloat16)

    # Case 1: f32 weights, small non-multiple-of-8 batch -> single grid step.
    N = 10
    t = jax.random.uniform(kt, (N,), jnp.float32, 0.0, 1000.0)
    ref = reference_timestep_embedder(t, params,
                                      frequency_embedding_size=freq_dim)
    out_f32 = jax.block_until_ready(
        timestep_embedder(t, params, frequency_embedding_size=freq_dim,
                          compute_dtype=jnp.float32))
    assert out_f32.shape == (N, hidden_size)
    assert jnp.allclose(out_f32, ref, atol=1e-4, rtol=1e-4), \
        f"f32 max abs err {jnp.max(jnp.abs(out_f32 - ref))}"

    # Case 2: default bf16 pre-cast weights (bandwidth path), f32 accumulation.
    out_bf16w = jax.block_until_ready(
        timestep_embedder(t, params_bf16, frequency_embedding_size=freq_dim))
    assert jnp.allclose(out_bf16w, ref, atol=5e-2, rtol=5e-2), \
        f"bf16-weight max abs err {jnp.max(jnp.abs(out_bf16w - ref))}"

    # Case 3: multi batch-tile grid exercising the padded tail + column tiling.
    N2 = 40
    t2 = jax.random.uniform(jax.random.PRNGKey(1), (N2,), jnp.float32,
                            0.0, 1000.0)
    ref2 = reference_timestep_embedder(t2, params,
                                       frequency_embedding_size=freq_dim)
    out2 = jax.block_until_ready(
        timestep_embedder(t2, params, frequency_embedding_size=freq_dim,
                          compute_dtype=jnp.float32, tm=16))
    assert out2.shape == (N2, hidden_size)
    assert jnp.allclose(out2, ref2, atol=1e-4, rtol=1e-4), \
        f"multi-tile max abs err {jnp.max(jnp.abs(out2 - ref2))}"

    # Case 4: bf16 output for a bf16 downstream consumer (adaLN modulation).
    out_bf16o = jax.block_until_ready(
        timestep_embedder(t, params_bf16, frequency_embedding_size=freq_dim,
                          out_dtype=jnp.bfloat16))
    assert out_bf16o.dtype == jnp.bfloat16
    assert jnp.allclose(out_bf16o.astype(jnp.float32), ref,
                        atol=5e-2, rtol=5e-2), \
        f"bf16-out max abs err {jnp.max(jnp.abs(out_bf16o.astype(jnp.float32) - ref))}"

    print("KERNEL_OK")
</pallas_src>

<mosaic_0001>
module attributes {stable_mosaic.version = 11 : i64} {
  func.func @timestep_embedder_kernel(%arg0: i32, %arg1: i32, %arg2: memref<16x128xf32, #tpu.memory_space<vmem>>, %arg3: memref<256x128xf32, #tpu.memory_space<vmem>>, %arg4: memref<1x128xf32, #tpu.memory_space<vmem>>, %arg5: memref<128x128xf32, #tpu.memory_space<vmem>>, %arg6: memref<1x128xf32, #tpu.memory_space<vmem>>, %arg7: memref<16x128xf32, #tpu.memory_space<vmem>>, %arg8: memref<16x128xf32, #tpu.memory_space<vmem>>) attributes {dimension_semantics = [#tpu.dimension_semantics<arbitrary>, #tpu.dimension_semantics<arbitrary>], iteration_bounds = array<i64: 1, 1>, scalar_prefetch = 0 : i64, scratch_operands = 1 : i64, tpu.core_type = #tpu.core_type<tc>, window_params = [{transform_indices = @transform_0, window_bounds = array<i64: 16, 128>}, {pipeline_mode = #tpu.pipeline_mode<synchronous>, transform_indices = @transform_1, window_bounds = array<i64: 256, 128>}, {pipeline_mode = #tpu.pipeline_mode<synchronous>, transform_indices = @transform_2, window_bounds = array<i64: 1, 128>}, {transform_indices = @transform_3, window_bounds = array<i64: 128, 128>}, {transform_indices = @transform_4, window_bounds = array<i64: 1, 128>}, {transform_indices = @transform_5, window_bounds = array<i64: 16, 128>}]} {
    %c0_i32 = arith.constant 0 : i32
    %0 = arith.cmpi eq, %arg1, %c0_i32 : i32
    %1 = arith.extui %0 : i1 to i32
    %c0_i32_0 = arith.constant 0 : i32
    %2 = arith.cmpi ne, %1, %c0_i32_0 : i32
    scf.if %2 {
      %c0_8 = arith.constant 0 : index
      %c0_9 = arith.constant 0 : index
      %10 = vector.load %arg2[%c0_8, %c0_9] : memref<16x128xf32, #tpu.memory_space<vmem>>, vector<16x128xf32>
      %11 = math.cos %10 : vector<16x128xf32>
      %12 = math.sin %10 : vector<16x128xf32>
      %13 = tpu.concatenate %11, %12 in 1 : vector<16x128xf32>, vector<16x128xf32> -> vector<16x256xf32>
      %c0_10 = arith.constant 0 : index
      %c0_11 = arith.constant 0 : index
      %14 = vector.load %arg3[%c0_10, %c0_11] : memref<256x128xf32, #tpu.memory_space<vmem>>, vector<256x128xf32>
      %cst_12 = arith.constant dense<0.000000e+00> : vector<16x128xf32>
      %15 = tpu.matmul %13, %14, %cst_12 {dimension_numbers = #tpu.dot_dimension_numbers<[1], [0], [0], [1], [0, 0, 1, 1], [], []>} : vector<16x256xf32>, vector<256x128xf32>, vector<16x128xf32> -> vector<16x128xf32>
      %c0_13 = arith.constant 0 : index
      %c0_14 = arith.constant 0 : index
      %16 = vector.load %arg4[%c0_13, %c0_14] : memref<1x128xf32, #tpu.memory_space<vmem>>, vector<1x128xf32>
      %17 = vector.broadcast %16 : vector<1x128xf32> to vector<16x128xf32>
      %18 = arith.addf %15, %17 : vector<16x128xf32>
      %19 = arith.negf %18 : vector<16x128xf32>
      %20 = math.exp %19 : vector<16x128xf32>
      %cst_15 = arith.constant 1.000000e+00 : f32
      %21 = vector.broadcast %cst_15 : f32 to vector<16x128xf32>
      %22 = arith.addf %21, %20 : vector<16x128xf32>
      %23 = arith.divf %21, %22 : vector<16x128xf32>
      %24 = arith.mulf %18, %23 : vector<16x128xf32>
      %c0_16 = arith.constant 0 : index
      %c0_17 = arith.constant 0 : index
      %25 = vector.load %arg8[%c0_16, %c0_17] : memref<16x128xf32, #tpu.memory_space<vmem>>, vector<16x128xf32>
      tpu.vector_store %arg8[%c0_16, %c0_17], %24 {strides = array<i32>} : memref<16x128xf32, #tpu.memory_space<vmem>>, vector<16x128xf32>,
    } else {
    }
    %c0 = arith.constant 0 : index
    %c0_1 = arith.constant 0 : index
    %3 = vector.load %arg8[%c0, %c0_1] : memref<16x128xf32, #tpu.memory_space<vmem>>, vector<16x128xf32>
    %c0_2 = arith.constant 0 : index
    %c0_3 = arith.constant 0 : index
    %4 = vector.load %arg5[%c0_2, %c0_3] : memref<128x128xf32, #tpu.memory_space<vmem>>, vector<128x128xf32>
    %cst = arith.constant dense<0.000000e+00> : vector<16x128xf32>
    %5 = tpu.matmul %3, %4, %cst {dimension_numbers = #tpu.dot_dimension_numbers<[1], [0], [0], [1], [0, 0, 1, 1], [], []>} : vector<16x128xf32>, vector<128x128xf32>, vector<16x128xf32> -> vector<16x128xf32>
    %c0_4 = arith.constant 0 : index
    %c0_5 = arith.constant 0 : index
    %6 = vector.load %arg6[%c0_4, %c0_5] : memref<1x128xf32, #tpu.memory_space<vmem>>, vector<1x128xf32>
    %7 = vector.broadcast %6 : vector<1x128xf32> to vector<16x128xf32>
    %8 = arith.addf %5, %7 : vector<16x128xf32>
    %c0_6 = arith.constant 0 : index
    %c0_7 = arith.constant 0 : index
    %9 = vector.load %arg7[%c0_6, %c0_7] : memref<16x128xf32, #tpu.memory_space<vmem>>, vector<16x128xf32>
    tpu.vector_store %arg7[%c0_6, %c0_7], %8 {strides = array<i32>} : memref<16x128xf32, #tpu.memory_space<vmem>>, vector<16x128xf32>,
    return
  }
  func.func @transform_0(%arg0: i32, %arg1: i32) -> (i32, i32) {
    %c0_i32 = arith.constant 0 : i32
    %c0_i32_0 = arith.constant 0 : i32
    return %arg0, %c0_i32 : i32, i32
  }
  func.func @transform_1(%arg0: i32, %arg1: i32) -> (i32, i32) {
    %c0_i32 = arith.constant 0 : i32
    %c0_i32_0 = arith.constant 0 : i32
    %c0_i32_1 = arith.constant 0 : i32
    return %c0_i32, %c0_i32_0 : i32, i32
  }
  func.func @transform_2(%arg0: i32, %arg1: i32) -> (i32, i32) {
    %c0_i32 = arith.constant 0 : i32
    %c0_i32_0 = arith.constant 0 : i32
    %c0_i32_1 = arith.constant 0 : i32
    return %c0_i32, %c0_i32_0 : i32, i32
  }
  func.func @transform_3(%arg0: i32, %arg1: i32) -> (i32, i32) {
    %c0_i32 = arith.constant 0 : i32
    %c0_i32_0 = arith.constant 0 : i32
    return %c0_i32, %arg1 : i32, i32
  }
  func.func @transform_4(%arg0: i32, %arg1: i32) -> (i32, i32) {
    %c0_i32 = arith.constant 0 : i32
    %c0_i32_0 = arith.constant 0 : i32
    return %c0_i32, %arg1 : i32, i32
  }
  func.func @transform_5(%arg0: i32, %arg1: i32) -> (i32, i32) {
    %c0_i32 = arith.constant 0 : i32
    return %arg0, %arg1 : i32, i32
  }
}

module attributes {stable_mosaic.version = 11 : i64} {
  func.func @timestep_embedder_kernel(%arg0: i32, %arg1: i32, %arg2: memref<16x128xf32, #tpu.memory_space<vmem>>, %arg3: memref<256x128xf32, #tpu.memory_space<vmem>>, %arg4: memref<1x128xf32, #tpu.memory_space<vmem>>, %arg5: memref<128x128xf32, #tpu.memory_space<vmem>>, %arg6: memref<1x128xf32, #tpu.memory_space<vmem>>, %arg7: memref<16x128xf32, #tpu.memory_space<vmem>>, %arg8: memref<16x128xf32, #tpu.memory_space<vmem>>) attributes {dimension_semantics = [#tpu.dimension_semantics<arbitrary>, #tpu.dimension_semantics<arbitrary>], iteration_bounds = array<i64: 1, 1>, scalar_prefetch = 0 : i64, scratch_operands = 1 : i64, tpu.core_type = #tpu.core_type<tc>, window_params = [{transform_indices = @transform_0, window_bounds = array<i64: 16, 128>}, {pipeline_mode = #tpu.pipeline_mode<synchronous>, transform_indices = @transform_1, window_bounds = array<i64: 256, 128>}, {pipeline_mode = #tpu.pipeline_mode<synchronous>, transform_indices = @transform_2, window_bounds = array<i64: 1, 128>}, {transform_indices = @transform_3, window_bounds = array<i64: 128, 128>}, {transform_indices = @transform_4, window_bounds = array<i64: 1, 128>}, {transform_indices = @transform_5, window_bounds = array<i64: 16, 128>}]} {
    %c0_i32 = arith.constant 0 : i32
    %0 = arith.cmpi eq, %arg1, %c0_i32 : i32
    %1 = arith.extui %0 : i1 to i32
    %c0_i32_0 = arith.constant 0 : i32
    %2 = arith.cmpi ne, %1, %c0_i32_0 : i32
    scf.if %2 {
      %c0_8 = arith.constant 0 : index
      %c0_9 = arith.constant 0 : index
      %10 = vector.load %arg2[%c0_8, %c0_9] : memref<16x128xf32, #tpu.memory_space<vmem>>, vector<16x128xf32>
      %11 = math.cos %10 : vector<16x128xf32>
      %12 = math.sin %10 : vector<16x128xf32>
      %13 = tpu.concatenate %11, %12 in 1 : vector<16x128xf32>, vector<16x128xf32> -> vector<16x256xf32>
      %c0_10 = arith.constant 0 : index
      %c0_11 = arith.constant 0 : index
      %14 = vector.load %arg3[%c0_10, %c0_11] : memref<256x128xf32, #tpu.memory_space<vmem>>, vector<256x128xf32>
      %cst_12 = arith.constant dense<0.000000e+00> : vector<16x128xf32>
      %15 = tpu.matmul %13, %14, %cst_12 {dimension_numbers = #tpu.dot_dimension_numbers<[1], [0], [0], [1], [0, 0, 1, 1], [], []>} : vector<16x256xf32>, vector<256x128xf32>, vector<16x128xf32> -> vector<16x128xf32>
      %c0_13 = arith.constant 0 : index
      %c0_14 = arith.constant 0 : index
      %16 = vector.load %arg4[%c0_13, %c0_14] : memref<1x128xf32, #tpu.memory_space<vmem>>, vector<1x128xf32>
      %17 = vector.broadcast %16 : vector<1x128xf32> to vector<16x128xf32>
      %18 = arith.addf %15, %17 : vector<16x128xf32>
      %19 = arith.negf %18 : vector<16x128xf32>
      %20 = math.exp %19 : vector<16x128xf32>
      %cst_15 = arith.constant 1.000000e+00 : f32
      %21 = vector.broadcast %cst_15 : f32 to vector<16x128xf32>
      %22 = arith.addf %21, %20 : vector<16x128xf32>
      %23 = arith.divf %21, %22 : vector<16x128xf32>
      %24 = arith.mulf %18, %23 : vector<16x128xf32>
      %c0_16 = arith.constant 0 : index
      %c0_17 = arith.constant 0 : index
      %25 = vector.load %arg8[%c0_16, %c0_17] : memref<16x128xf32, #tpu.memory_space<vmem>>, vector<16x128xf32>
      tpu.vector_store %arg8[%c0_16, %c0_17], %24 {strides = array<i32>} : memref<16x128xf32, #tpu.memory_space<vmem>>, vector<16x128xf32>,
    } else {
    }
    %c0 = arith.constant 0 : index
    %c0_1 = arith.constant 0 : index
    %3 = vector.load %arg8[%c0, %c0_1] : memref<16x128xf32, #tpu.memory_space<vmem>>, vector<16x128xf32>
    %c0_2 = arith.constant 0 : index
    %c0_3 = arith.constant 0 : index
    %4 = vector.load %arg5[%c0_2, %c0_3] : memref<128x128xf32, #tpu.memory_space<vmem>>, vector<128x128xf32>
    %cst = arith.constant dense<0.000000e+00> : vector<16x128xf32>
    %5 = tpu.matmul %3, %4, %cst {dimension_numbers = #tpu.dot_dimension_numbers<[1], [0], [0], [1], [0, 0, 1, 1], [], []>} : vector<16x128xf32>, vector<128x128xf32>, vector<16x128xf32> -> vector<16x128xf32>
    %c0_4 = arith.constant 0 : index
    %c0_5 = arith.constant 0 : index
    %6 = vector.load %arg6[%c0_4, %c0_5] : memref<1x128xf32, #tpu.memory_space<vmem>>, vector<1x128xf32>
    %7 = vector.broadcast %6 : vector<1x128xf32> to vector<16x128xf32>
    %8 = arith.addf %5, %7 : vector<16x128xf32>
    %c0_6 = arith.constant 0 : index
    %c0_7 = arith.constant 0 : index
    %9 = vector.load %arg7[%c0_6, %c0_7] : memref<16x128xf32, #tpu.memory_space<vmem>>, vector<16x128xf32>
    tpu.vector_store %arg7[%c0_6, %c0_7], %8 {strides = array<i32>} : memref<16x128xf32, #tpu.memory_space<vmem>>, vector<16x128xf32>,
    return
  }
  func.func @transform_0(%arg0: i32, %arg1: i32) -> (i32, i32) {
    %c0_i32 = arith.constant 0 : i32
    %c0_i32_0 = arith.constant 0 : i32
    return %arg0, %c0_i32 : i32, i32
  }
  func.func @transform_1(%arg0: i32, %arg1: i32) -> (i32, i32) {
    %c0_i32 = arith.constant 0 : i32
    %c0_i32_0 = arith.constant 0 : i32
    %c0_i32_1 = arith.constant 0 : i32
    return %c0_i32, %c0_i32_0 : i32, i32
  }
  func.func @transform_2(%arg0: i32, %arg1: i32) -> (i32, i32) {
    %c0_i32 = arith.constant 0 : i32
    %c0_i32_0 = arith.constant 0 : i32
    %c0_i32_1 = arith.constant 0 : i32
    return %c0_i32, %c0_i32_0 : i32, i32
  }
  func.func @transform_3(%arg0: i32, %arg1: i32) -> (i32, i32) {
    %c0_i32 = arith.constant 0 : i32
    %c0_i32_0 = arith.constant 0 : i32
    return %c0_i32, %arg1 : i32, i32
  }
  func.func @transform_4(%arg0: i32, %arg1: i32) -> (i32, i32) {
    %c0_i32 = arith.constant 0 : i32
    %c0_i32_0 = arith.constant 0 : i32
    return %c0_i32, %arg1 : i32, i32
  }
  func.func @transform_5(%arg0: i32, %arg1: i32) -> (i32, i32) {
    %c0_i32 = arith.constant 0 : i32
    return %arg0, %arg1 : i32, i32
  }
}

</mosaic_0001>

<llo_original>
// kernel: tpu_custom_call.1
$region0: #{tpu_custom_call.1}
  #allocation0 [shape = 'u32[]', space=smem, size = 0x4, offset = 0x4, fixed_abs, tag = 'smem constant byte address 0x4 - core index']
  #allocation1 [shape = 'u32[144,128]{1,0:T(1,128)}', space=vmem, size = 0x12000, scoped, tag = 'internal scratch']
  #allocation2 [shape = 'f32[16,128]{1,0:T(8,128)}', space=vmem, size = 0x2000, scoped, tag = 'scratch operand']
  %s0 = inlined_call_operand.hbm [shape: f32[16,128], index: 0, kind: input, shape index: {}]
  %s1 = inlined_call_operand.hbm [shape: f32[256,128], index: 1, kind: input, shape index: {}]
  %s2 = inlined_call_operand.vmem [shape: f32[1,128], index: 2, kind: input, shape index: {}]
  %s3 = inlined_call_operand.hbm [shape: f32[128,128], index: 3, kind: input, shape index: {}]
  %s4 = inlined_call_operand.vmem [shape: f32[1,128], index: 4, kind: input, shape index: {}]
  %s5 = inlined_call_operand.hbm [shape: f32[16,128], index: 5, kind: output, shape index: {}]
  %s6 = sld [smem:[#allocation0]]
  $region46: #{tpu_custom_call.1} parent=0
    _
  %s8 = ssub.s32 1, %s6
  %s9 = scalar_select 0, %s8, %s6
  $region1: #{tpu_custom_call.1} parent=0
    #allocation3 [shape = 'u8[8192]{0}', space=vmem, size = 0x2000, scoped, tag = 'input window, operand 0, single buffered']
    #allocation4 [shape = 's32[1]{0}', space=sflag, size = 0x4, scoped, tag = 'scoped memory for tpu_custom_call.1']
    #allocation5 [shape = 's32[1]{0}', space=sflag, size = 0x4, scoped, tag = 'scoped memory for tpu_custom_call.1']
    #allocation6 [shape = 'u8[131072]{0}', space=vmem, size = 0x20000, scoped, tag = 'input window, operand 1, single buffered']
    #allocation7 [shape = 's32[1]{0}', space=sflag, size = 0x4, scoped, tag = 'scoped memory for tpu_custom_call.1']
    #allocation8 [shape = 'u8[65536]{0}', space=vmem, size = 0x10000, scoped, tag = 'input window, operand 3, single buffered']
    #allocation9 [shape = 'u8[8192]{0}', space=vmem, size = 0x2000, scoped, tag = 'output window, operand 0, single buffered']
    %10 = vsyncpa [#allocation4], 0
    %11 = vsyncpa [#allocation7], 0
    %12 = vsyncpa [#allocation5], 0
    // Predicated region
    $region2: #{tpu_custom_call.1} parent=1 // pred_check
      _
    $region3: #{tpu_custom_call.1} parent=1 // pred_check_branch
      %14 = sbr.rel (0) target = $region5
    $region4: #{tpu_custom_call.1} parent=1 // pred_region
      %s16 = ssub.s32 256, 256
      %17 = vsyncadd [#allocation4], %s16
      %s18 = sshll.u32 [#allocation3], 4
      %s19 = int_to_ptr.vmem [resolvable:$true] %s18
      %24 = dma.hbm_to_vmem [thread:$0]  %s0, 256, %s19, [#allocation4], 128, 128, 8
    $region5: #{tpu_custom_call.1} parent=1 // pred_fallthru
      _
    // Predicated region
    $region6: #{tpu_custom_call.1} parent=1 // pred_check
      _
    $region7: #{tpu_custom_call.1} parent=1 // pred_check_branch
      %26 = sbr.rel (0) target = $region9
    $region8: #{tpu_custom_call.1} parent=1 // pred_region
      %s28 = ssub.s32 4096, 4096
      %29 = vsyncadd [#allocation7], %s28
      %s30 = sshll.u32 [#allocation6], 4
      %s31 = int_to_ptr.vmem [resolvable:$true] %s30
      %36 = dma.hbm_to_vmem [thread:$0]  %s1, 4096, %s31, [#allocation7], 128, 128, 8
    $region9: #{tpu_custom_call.1} parent=1 // pred_fallthru
      _
    // Predicated region
    $region10: #{tpu_custom_call.1} parent=1 // pred_check
      _
    $region11: #{tpu_custom_call.1} parent=1 // pred_check_branch
      %38 = sbr.rel (0) target = $region13
    $region12: #{tpu_custom_call.1} parent=1 // pred_region
      _
    $region13: #{tpu_custom_call.1} parent=1 // pred_fallthru
      _
    // Predicated region
    $region14: #{tpu_custom_call.1} parent=1 // pred_check
      _
    $region15: #{tpu_custom_call.1} parent=1 // pred_check_branch
      %40 = sbr.rel (0) target = $region17
    $region16: #{tpu_custom_call.1} parent=1 // pred_region
      %s42 = ssub.s32 2048, 2048
      %43 = vsyncadd [#allocation7], %s42
      %s44 = sshll.u32 [#allocation8], 4
      %s45 = int_to_ptr.vmem [resolvable:$true] %s44
      %50 = dma.hbm_to_vmem [thread:$0]  %s3, 2048, %s45, [#allocation7], 128, 128, 8
    $region17: #{tpu_custom_call.1} parent=1 // pred_fallthru
      _
    // Predicated region
    $region18: #{tpu_custom_call.1} parent=1 // pred_check
      _
    $region19: #{tpu_custom_call.1} parent=1 // pred_check_branch
      %52 = sbr.rel (0) target = $region21
    $region20: #{tpu_custom_call.1} parent=1 // pred_region
      _
    $region21: #{tpu_custom_call.1} parent=1 // pred_fallthru
      _
    // Predicated region
    $region22: #{tpu_custom_call.1} parent=1 // pred_check
      _
    $region23: #{tpu_custom_call.1} parent=1 // pred_check_branch
      %54 = sbr.rel (0) target = $region25
    $region24: #{tpu_custom_call.1} parent=1 // pred_region
      %55 = dma.done [#allocation4], 256
    $region25: #{tpu_custom_call.1} parent=1 // pred_fallthru
      _
    // Predicated region
    $region26: #{tpu_custom_call.1} parent=1 // pred_check
      _
    $region27: #{tpu_custom_call.1} parent=1 // pred_check_branch
      %57 = sbr.rel (0) target = $region29
    $region28: #{tpu_custom_call.1} parent=1 // pred_region
      %58 = dma.done [#allocation7], 4096
    $region29: #{tpu_custom_call.1} parent=1 // pred_fallthru
      _
    // Predicated region
    $region30: #{tpu_custom_call.1} parent=1 // pred_check
      _
    $region31: #{tpu_custom_call.1} parent=1 // pred_check_branch
      %60 = sbr.rel (0) target = $region33
    $region32: #{tpu_custom_call.1} parent=1 // pred_region
      %61 = dma.done [#allocation7], 2048
    $region33: #{tpu_custom_call.1} parent=1 // pred_fallthru
      _
    %p62 = scmp.eq.s32.totalorder 0, 0
    // Predicated region
    $region34: #{tpu_custom_call.1} parent=1 // pred_check
      %p63 = pneg %p62
    $region35: #{tpu_custom_call.1} parent=1 // pred_check_branch
      %65 = sbr.rel (%p63) target = $region37
    $region36: #{tpu_custom_call.1} parent=1 // pred_region
      %v66 = vld [vmem:[#allocation3] sm:$0xff]
      %v67 = vld [vmem:[#allocation3 + $0x8] sm:$0xff]
      %v68 = vand.u32 2147483647, %v66
      %vm69 = vcmp.le.f32.partialorder %v68, 0.7853982
      %vm70 = vcmp.lt.s32.totalorder %v66, 0
      %v71 = vand.u32 %v66, 2139095040
      %v72 = vshrl.u32 %v71, 23
      %v73 = vsub.s32 %v72, 127
      %v74 = vand.u32 2147483647, %v66
      %v75 = vand.u32 %v74, 8388607
      %v76 = vor.u32 %v75, 8388608
      %v77 = vsub.s32 0, %v76
      %v78 = vadd.s32 %v73, 1
      %vm79 = vcmp.gt.s32.totalorder %v78, 0
      %v80 = vsel %vm79, %v78, 0
      %v81 = vshrl.u32 %v80, 5
      %v82 = vand.u32 %v80, 31
      %v83 = vsub.s32 32, %v82
      %v84 = vshrl.u32 683565275, %v83
      %v85 = vshll.u32 683565275, %v82
      %v86 = vshrl.u32 2475754826, %v83
      %v87 = vor.u32 %v85, %v86
      %v88 = vshll.u32 2475754826, %v82
      %v89 = vshrl.u32 2131351028, %v83
      %v90 = vor.u32 %v88, %v89
      %v91 = vshll.u32 2131351028, %v82
      %v92 = vshrl.u32 2102212464, %v83
      %v93 = vor.u32 %v91, %v92
      %v94 = vshll.u32 2102212464, %v82
      %v95 = vshrl.u32 920167782, %v83
      %v96 = vor.u32 %v94, %v95
      %v97 = vshll.u32 920167782, %v82
      %v98 = vshrl.u32 1326507024, %v83
      %v99 = vor.u32 %v97, %v98
      %vm100 = vcmp.lt.s32.totalorder %v81, 1
      %vm101 = vcmp.lt.s32.totalorder %v81, 2
      %vm102 = vcmp.lt.s32.totalorder %v81, 3
      %vm103 = vcmp.lt.s32.totalorder %v81, 4
      %v104 = vsel %vm100, %v84, %v87
      %v105 = vsel %vm103, %v93, 2102212464
      %v106 = vsel %vm102, %v90, %v105
      %v107 = vsel %vm101, %v104, %v106
      %v108 = vsel %vm100, %v87, %v90
      %v109 = vsel %vm103, %v96, 920167782
      %v110 = vsel %vm102, %v93, %v109
      %v111 = vsel %vm101, %v108, %v110
      %v112 = vsel %vm100, %v90, %v93
      %v113 = vsel %vm103, %v99, 1326507024
      %v114 = vsel %vm102, %v96, %v113
      %v115 = vsel %vm101, %v112, %v114
      %v116 = vshll.u32 %v76, 8
      %v117 = vmul.u32.u64.compose %v116, %v115
      %v118 = vextract.low.u32 %v117
      %v119 = vextract.high.u32 %v117
      %v120 = vmul.u32.u64.compose %v116, %v111
      %v121 = vextract.low.u32 %v120
      %v122 = vextract.high.u32 %v120
      %v123 = vmul.u32 %v116, %v107
      %v124 = vadd.s32 %v119, %v121
      %vm125 = vc.u32 %v119, %v121
      %v126 = vadd.s32 %v122, 1
      %v127 = vsel %vm125, %v126, %v122
      %v128 = vadd.s32 %v123, %v127
      %v129 = vadd.s32 %v128, 536870912
      %v130 = vshrl.u32 %v129, 30
      %v131 = vshll.u32 %v130, 30
      %v132 = vsub.s32 %v128, %v131
      %vm133 = vcmp.lt.s32.totalorder %v132, 0
      %v134 = vsub.s32 0, %v132
      %v135 = vsel %vm133, %v134, %v132
      %v136 = vclz %v135
      %v137 = vsub.s32 %v136, 2
      %vm138 = vcmp.gt.s32.totalorder 0, %v137
      %v139 = vsel %vm138, 0, %v137
      %v140 = vsub.s32 32, %v139
      %v141 = vshll.u32 %v132, %v139
      %v142 = vshrl.u32 %v124, %v140
      %v143 = vor.u32 %v141, %v142
      %v144 = vsub.s32 4294967266, %v139
      %v145 = vadd.s32 %v144, 127
      %v146 = vshll.u32 %v145, 23
      %v147 = vor.u32 4788187, %v146
      %v148 = vand.u32 2147483647, %v147
      %v150 = vcvt.s32.f32 %v143
      %v151 = vmul.f32 %v150, %v148
      %v152 = vxor.u32 %v151, 2147483648
      %v153 = vsel %vm70, %v152, %v151
      %v154 = vsub.s32 4, %v130
      %v155 = vsel %vm70, %v154, %v130
      %v156 = vsel %vm69, %v66, %v153
      %v157 = vsel %vm69, 0, %v155
      %v158 = vcosq.f32.pop %v156
      %v159 = vsinq.f32.pop %v156
      %vm160 = vweird.f32 %v66
      %v161 = vand.u32 %v157, 3
      %vm162 = vcmp.lt.s32.totalorder %v161, 2
      %vm163 = vcmp.eq.s32.totalorder %v161, 0
      %v164 = vxor.u32 %v159, 2147483648
      %v165 = vsel %vm163, %v158, %v164
      %vm166 = vcmp.eq.s32.totalorder %v161, 2
      %v167 = vxor.u32 %v158, 2147483648
      %v168 = vsel %vm166, %v167, %v159
      %v169 = vsel %vm162, %v165, %v168
      %v170 = vsel %vm160, nan, %v169
      %v171 = vand.u32 2147483647, %v67
      %vm172 = vcmp.le.f32.partialorder %v171, 0.7853982
      %vm173 = vcmp.lt.s32.totalorder %v67, 0
      %v174 = vand.u32 %v67, 2139095040
      %v175 = vshrl.u32 %v174, 23
      %v176 = vsub.s32 %v175, 127
      %v177 = vand.u32 2147483647, %v67
      %v178 = vand.u32 %v177, 8388607
      %v179 = vor.u32 %v178, 8388608
      %v180 = vsub.s32 0, %v179
      %v181 = vadd.s32 %v176, 1
      %vm182 = vcmp.gt.s32.totalorder %v181, 0
      %v183 = vsel %vm182, %v181, 0
      %v184 = vshrl.u32 %v183, 5
      %v185 = vand.u32 %v183, 31
      %v186 = vsub.s32 32, %v185
      %v187 = vshrl.u32 683565275, %v186
      %v188 = vshll.u32 683565275, %v185
      %v189 = vshrl.u32 2475754826, %v186
      %v190 = vor.u32 %v188, %v189
      %v191 = vshll.u32 2475754826, %v185
      %v192 = vshrl.u32 2131351028, %v186
      %v193 = vor.u32 %v191, %v192
      %v194 = vshll.u32 2131351028, %v185
      %v195 = vshrl.u32 2102212464, %v186
      %v196 = vor.u32 %v194, %v195
      %v197 = vshll.u32 2102212464, %v185
      %v198 = vshrl.u32 920167782, %v186
      %v199 = vor.u32 %v197, %v198
      %v200 = vshll.u32 920167782, %v185
      %v201 = vshrl.u32 1326507024, %v186
      %v202 = vor.u32 %v200, %v201
      %vm203 = vcmp.lt.s32.totalorder %v184, 1
      %vm204 = vcmp.lt.s32.totalorder %v184, 2
      %vm205 = vcmp.lt.s32.totalorder %v184, 3
      %vm206 = vcmp.lt.s32.totalorder %v184, 4
      %v207 = vsel %vm203, %v187, %v190
      %v208 = vsel %vm206, %v196, 2102212464
      %v209 = vsel %vm205, %v193, %v208
      %v210 = vsel %vm204, %v207, %v209
      %v211 = vsel %vm203, %v190, %v193
      %v212 = vsel %vm206, %v199, 920167782
      %v213 = vsel %vm205, %v196, %v212
      %v214 = vsel %vm204, %v211, %v213
      %v215 = vsel %vm203, %v193, %v196
      %v216 = vsel %vm206, %v202, 1326507024
      %v217 = vsel %vm205, %v199, %v216
      %v218 = vsel %vm204, %v215, %v217
      %v219 = vshll.u32 %v179, 8
      %v220 = vmul.u32.u64.compose %v219, %v218
      %v221 = vextract.low.u32 %v220
      %v222 = vextract.high.u32 %v220
      %v223 = vmul.u32.u64.compose %v219, %v214
      %v224 = vextract.low.u32 %v223
      %v225 = vextract.high.u32 %v223
      %v226 = vmul.u32 %v219, %v210
      %v227 = vadd.s32 %v222, %v224
      %vm228 = vc.u32 %v222, %v224
      %v229 = vadd.s32 %v225, 1
      %v230 = vsel %vm228, %v229, %v225
      %v231 = vadd.s32 %v226, %v230
      %v232 = vadd.s32 %v231, 536870912
      %v233 = vshrl.u32 %v232, 30
      %v234 = vshll.u32 %v233, 30
      %v235 = vsub.s32 %v231, %v234
      %vm236 = vcmp.lt.s32.totalorder %v235, 0
      %v237 = vsub.s32 0, %v235
      %v238 = vsel %vm236, %v237, %v235
      %v239 = vclz %v238
      %v240 = vsub.s32 %v239, 2
      %vm241 = vcmp.gt.s32.totalorder 0, %v240
      %v242 = vsel %vm241, 0, %v240
      %v243 = vsub.s32 32, %v242
      %v244 = vshll.u32 %v235, %v242
      %v245 = vshrl.u32 %v227, %v243
      %v246 = vor.u32 %v244, %v245
      %v247 = vsub.s32 4294967266, %v242
      %v248 = vadd.s32 %v247, 127
      %v249 = vshll.u32 %v248, 23
      %v250 = vor.u32 4788187, %v249
      %v251 = vand.u32 2147483647, %v250
      %v253 = vcvt.s32.f32 %v246
      %v254 = vmul.f32 %v253, %v251
      %v255 = vxor.u32 %v254, 2147483648
      %v256 = vsel %vm173, %v255, %v254
      %v257 = vsub.s32 4, %v233
      %v258 = vsel %vm173, %v257, %v233
      %v259 = vsel %vm172, %v67, %v256
      %v260 = vsel %vm172, 0, %v258
      %v261 = vcosq.f32.pop %v259
      %v262 = vsinq.f32.pop %v259
      %vm263 = vweird.f32 %v67
      %v264 = vand.u32 %v260, 3
      %vm265 = vcmp.lt.s32.totalorder %v264, 2
      %vm266 = vcmp.eq.s32.totalorder %v264, 0
      %v267 = vxor.u32 %v262, 2147483648
      %v268 = vsel %vm266, %v261, %v267
      %vm269 = vcmp.eq.s32.totalorder %v264, 2
      %v270 = vxor.u32 %v261, 2147483648
      %v271 = vsel %vm269, %v270, %v262
      %v272 = vsel %vm265, %v268, %v271
      %v273 = vsel %vm263, nan, %v272
      %v274 = vand.u32 2147483647, %v66
      %vm275 = vcmp.le.f32.partialorder %v274, 0.7853982
      %vm276 = vcmp.lt.s32.totalorder %v66, 0
      %v277 = vand.u32 %v66, 2139095040
      %v278 = vshrl.u32 %v277, 23
      %v279 = vsub.s32 %v278, 127
      %v280 = vand.u32 2147483647, %v66
      %v281 = vand.u32 %v280, 8388607
      %v282 = vor.u32 %v281, 8388608
      %v283 = vsub.s32 0, %v282
      %v284 = vadd.s32 %v279, 1
      %vm285 = vcmp.gt.s32.totalorder %v284, 0
      %v286 = vsel %vm285, %v284, 0
      %v287 = vshrl.u32 %v286, 5
      %v288 = vand.u32 %v286, 31
      %v289 = vsub.s32 32, %v288
      %v290 = vshrl.u32 683565275, %v289
      %v291 = vshll.u32 683565275, %v288
      %v292 = vshrl.u32 2475754826, %v289
      %v293 = vor.u32 %v291, %v292
      %v294 = vshll.u32 2475754826, %v288
      %v295 = vshrl.u32 2131351028, %v289
      %v296 = vor.u32 %v294, %v295
      %v297 = vshll.u32 2131351028, %v288
      %v298 = vshrl.u32 2102212464, %v289
      %v299 = vor.u32 %v297, %v298
      %v300 = vshll.u32 2102212464, %v288
      %v301 = vshrl.u32 920167782, %v289
      %v302 = vor.u32 %v300, %v301
      %v303 = vshll.u32 920167782, %v288
      %v304 = vshrl.u32 1326507024, %v289
      %v305 = vor.u32 %v303, %v304
      %vm306 = vcmp.lt.s32.totalorder %v287, 1
      %vm307 = vcmp.lt.s32.totalorder %v287, 2
      %vm308 = vcmp.lt.s32.totalorder %v287, 3
      %vm309 = vcmp.lt.s32.totalorder %v287, 4
      %v310 = vsel %vm306, %v290, %v293
      %v311 = vsel %vm309, %v299, 2102212464
      %v312 = vsel %vm308, %v296, %v311
      %v313 = vsel %vm307, %v310, %v312
      %v314 = vsel %vm306, %v293, %v296
      %v315 = vsel %vm309, %v302, 920167782
      %v316 = vsel %vm308, %v299, %v315
      %v317 = vsel %vm307, %v314, %v316
      %v318 = vsel %vm306, %v296, %v299
      %v319 = vsel %vm309, %v305, 1326507024
      %v320 = vsel %vm308, %v302, %v319
      %v321 = vsel %vm307, %v318, %v320
      %v322 = vshll.u32 %v282, 8
      %v323 = vmul.u32.u64.compose %v322, %v321
      %v324 = vextract.low.u32 %v323
      %v325 = vextract.high.u32 %v323
      %v326 = vmul.u32.u64.compose %v322, %v317
      %v327 = vextract.low.u32 %v326
      %v328 = vextract.high.u32 %v326
      %v329 = vmul.u32 %v322, %v313
      %v330 = vadd.s32 %v325, %v327
      %vm331 = vc.u32 %v325, %v327
      %v332 = vadd.s32 %v328, 1
      %v333 = vsel %vm331, %v332, %v328
      %v334 = vadd.s32 %v329, %v333
      %v335 = vadd.s32 %v334, 536870912
      %v336 = vshrl.u32 %v335, 30
      %v337 = vshll.u32 %v336, 30
      %v338 = vsub.s32 %v334, %v337
      %vm339 = vcmp.lt.s32.totalorder %v338, 0
      %v340 = vsub.s32 0, %v338
      %v341 = vsel %vm339, %v340, %v338
      %v342 = vclz %v341
      %v343 = vsub.s32 %v342, 2
      %vm344 = vcmp.gt.s32.totalorder 0, %v343
      %v345 = vsel %vm344, 0, %v343
      %v346 = vsub.s32 32, %v345
      %v347 = vshll.u32 %v338, %v345
      %v348 = vshrl.u32 %v330, %v346
      %v349 = vor.u32 %v347, %v348
      %v350 = vsub.s32 4294967266, %v345
      %v351 = vadd.s32 %v350, 127
      %v352 = vshll.u32 %v351, 23
      %v353 = vor.u32 4788187, %v352
      %v354 = vand.u32 2147483647, %v353
      %v356 = vcvt.s32.f32 %v349
      %v357 = vmul.f32 %v356, %v354
      %v358 = vxor.u32 %v357, 2147483648
      %v359 = vsel %vm276, %v358, %v357
      %v360 = vsub.s32 4, %v336
      %v361 = vsel %vm276, %v360, %v336
      %v362 = vsel %vm275, %v66, %v359
      %v363 = vsel %vm275, 0, %v361
      %v364 = vcosq.f32.pop %v362
      %v365 = vsinq.f32.pop %v362
      %vm366 = vweird.f32 %v66
      %v367 = vadd.s32 %v363, 3
      %v368 = vand.u32 %v367, 3
      %vm369 = vcmp.lt.s32.totalorder %v368, 2
      %vm370 = vcmp.eq.s32.totalorder %v368, 0
      %v371 = vxor.u32 %v365, 2147483648
      %v372 = vsel %vm370, %v364, %v371
      %vm373 = vcmp.eq.s32.totalorder %v368, 2
      %v374 = vxor.u32 %v364, 2147483648
      %v375 = vsel %vm373, %v374, %v365
      %v376 = vsel %vm369, %v372, %v375
      %v377 = vsel %vm366, nan, %v376
      %v378 = vand.u32 2147483647, %v67
      %vm379 = vcmp.le.f32.partialorder %v378, 0.7853982
      %vm380 = vcmp.lt.s32.totalorder %v67, 0
      %v381 = vand.u32 %v67, 2139095040
      %v382 = vshrl.u32 %v381, 23
      %v383 = vsub.s32 %v382, 127
      %v384 = vand.u32 2147483647, %v67
      %v385 = vand.u32 %v384, 8388607
      %v386 = vor.u32 %v385, 8388608
      %v387 = vsub.s32 0, %v386
      %v388 = vadd.s32 %v383, 1
      %vm389 = vcmp.gt.s32.totalorder %v388, 0
      %v390 = vsel %vm389, %v388, 0
      %v391 = vshrl.u32 %v390, 5
      %v392 = vand.u32 %v390, 31
      %v393 = vsub.s32 32, %v392
      %v394 = vshrl.u32 683565275, %v393
      %v395 = vshll.u32 683565275, %v392
      %v396 = vshrl.u32 2475754826, %v393
      %v397 = vor.u32 %v395, %v396
      %v398 = vshll.u32 2475754826, %v392
      %v399 = vshrl.u32 2131351028, %v393
      %v400 = vor.u32 %v398, %v399
      %v401 = vshll.u32 2131351028, %v392
      %v402 = vshrl.u32 2102212464, %v393
      %v403 = vor.u32 %v401, %v402
      %v404 = vshll.u32 2102212464, %v392
      %v405 = vshrl.u32 920167782, %v393
      %v406 = vor.u32 %v404, %v405
      %v407 = vshll.u32 920167782, %v392
      %v408 = vshrl.u32 1326507024, %v393
      %v409 = vor.u32 %v407, %v408
      %vm410 = vcmp.lt.s32.totalorder %v391, 1
      %vm411 = vcmp.lt.s32.totalorder %v391, 2
      %vm412 = vcmp.lt.s32.totalorder %v391, 3
      %vm413 = vcmp.lt.s32.totalorder %v391, 4
      %v414 = vsel %vm410, %v394, %v397
      %v415 = vsel %vm413, %v403, 2102212464
      %v416 = vsel %vm412, %v400, %v415
      %v417 = vsel %vm411, %v414, %v416
      %v418 = vsel %vm410, %v397, %v400
      %v419 = vsel %vm413, %v406, 920167782
      %v420 = vsel %vm412, %v403, %v419
      %v421 = vsel %vm411, %v418, %v420
      %v422 = vsel %vm410, %v400, %v403
      %v423 = vsel %vm413, %v409, 1326507024
      %v424 = vsel %vm412, %v406, %v423
      %v425 = vsel %vm411, %v422, %v424
      %v426 = vshll.u32 %v386, 8
      %v427 = vmul.u32.u64.compose %v426, %v425
      %v428 = vextract.low.u32 %v427
      %v429 = vextract.high.u32 %v427
      %v430 = vmul.u32.u64.compose %v426, %v421
      %v431 = vextract.low.u32 %v430
      %v432 = vextract.high.u32 %v430
      %v433 = vmul.u32 %v426, %v417
      %v434 = vadd.s32 %v429, %v431
      %vm435 = vc.u32 %v429, %v431
      %v436 = vadd.s32 %v432, 1
      %v437 = vsel %vm435, %v436, %v432
      %v438 = vadd.s32 %v433, %v437
      %v439 = vadd.s32 %v438, 536870912
      %v440 = vshrl.u32 %v439, 30
      %v441 = vshll.u32 %v440, 30
      %v442 = vsub.s32 %v438, %v441
      %vm443 = vcmp.lt.s32.totalorder %v442, 0
      %v444 = vsub.s32 0, %v442
      %v445 = vsel %vm443, %v444, %v442
      %v446 = vclz %v445
      %v447 = vsub.s32 %v446, 2
      %vm448 = vcmp.gt.s32.totalorder 0, %v447
      %v449 = vsel %vm448, 0, %v447
      %v450 = vsub.s32 32, %v449
      %v451 = vshll.u32 %v442, %v449
      %v452 = vshrl.u32 %v434, %v450
      %v453 = vor.u32 %v451, %v452
      %v454 = vsub.s32 4294967266, %v449
      %v455 = vadd.s32 %v454, 127
      %v456 = vshll.u32 %v455, 23
      %v457 = vor.u32 4788187, %v456
      %v458 = vand.u32 2147483647, %v457
      %v460 = vcvt.s32.f32 %v453
      %v461 = vmul.f32 %v460, %v458
      %v462 = vxor.u32 %v461, 2147483648
      %v463 = vsel %vm380, %v462, %v461
      %v464 = vsub.s32 4, %v440
      %v465 = vsel %vm380, %v464, %v440
      %v466 = vsel %vm379, %v67, %v463
      %v467 = vsel %vm379, 0, %v465
      %v468 = vcosq.f32.pop %v466
      %v469 = vsinq.f32.pop %v466
      %vm470 = vweird.f32 %v67
      %v471 = vadd.s32 %v467, 3
      %v472 = vand.u32 %v471, 3
      %vm473 = vcmp.lt.s32.totalorder %v472, 2
      %vm474 = vcmp.eq.s32.totalorder %v472, 0
      %v475 = vxor.u32 %v469, 2147483648
      %v476 = vsel %vm474, %v468, %v475
      %vm477 = vcmp.eq.s32.totalorder %v472, 2
      %v478 = vxor.u32 %v468, 2147483648
      %v479 = vsel %vm477, %v478, %v469
      %v480 = vsel %vm473, %v476, %v479
      %v481 = vsel %vm470, nan, %v480
      %v482 = vld [vmem:[#allocation6] sm:$0xff]
      %v483 = vld [vmem:[#allocation6 + $0x8] sm:$0xff]
      %v484 = vld [vmem:[#allocation6 + $0x10] sm:$0xff]
      %v485 = vld [vmem:[#allocation6 + $0x18] sm:$0xff]
      %v486 = vld [vmem:[#allocation6 + $0x20] sm:$0xff]
      %v487 = vld [vmem:[#allocation6 + $0x28] sm:$0xff]
      %v488 = vld [vmem:[#allocation6 + $0x30] sm:$0xff]
      %v489 = vld [vmem:[#allocation6 + $0x38] sm:$0xff]
      %v490 = vld [vmem:[#allocation6 + $0x40] sm:$0xff]
      %v491 = vld [vmem:[#allocation6 + $0x48] sm:$0xff]
      %v492 = vld [vmem:[#allocation6 + $0x50] sm:$0xff]
      %v493 = vld [vmem:[#allocation6 + $0x58] sm:$0xff]
      %v494 = vld [vmem:[#allocation6 + $0x60] sm:$0xff]
      %v495 = vld [vmem:[#allocation6 + $0x68] sm:$0xff]
      %v496 = vld [vmem:[#allocation6 + $0x70] sm:$0xff]
      %v497 = vld [vmem:[#allocation6 + $0x78] sm:$0xff]
      %v498 = vld [vmem:[#allocation6 + $0x80] sm:$0xff]
      %v499 = vld [vmem:[#allocation6 + $0x88] sm:$0xff]
      %v500 = vld [vmem:[#allocation6 + $0x90] sm:$0xff]
      %v501 = vld [vmem:[#allocation6 + $0x98] sm:$0xff]
      %v502 = vld [vmem:[#allocation6 + $0xa0] sm:$0xff]
      %v503 = vld [vmem:[#allocation6 + $0xa8] sm:$0xff]
      %v504 = vld [vmem:[#allocation6 + $0xb0] sm:$0xff]
      %v505 = vld [vmem:[#allocation6 + $0xb8] sm:$0xff]
      %v506 = vld [vmem:[#allocation6 + $0xc0] sm:$0xff]
      %v507 = vld [vmem:[#allocation6 + $0xc8] sm:$0xff]
      %v508 = vld [vmem:[#allocation6 + $0xd0] sm:$0xff]
      %v509 = vld [vmem:[#allocation6 + $0xd8] sm:$0xff]
      %v510 = vld [vmem:[#allocation6 + $0xe0] sm:$0xff]
      %v511 = vld [vmem:[#allocation6 + $0xe8] sm:$0xff]
      %v512 = vld [vmem:[#allocation6 + $0xf0] sm:$0xff]
      %v513 = vld [vmem:[#allocation6 + $0xf8] sm:$0xff]
      %v514 = vld [vmem:[%s2] sm:$0x1]
      %v516 = vlaneseq
      %v517 = vshrl.u32 %v516, 7
      %v518 = vsub.s32 0, %v517
      %v519 = vrot.slane %v514, %v518
      %521 = vmatprep.subr.mxu0 0.0
      %522 = vmatpush1.msra.mxu0 %v482
      %523 = vmatprep.subr.mxu0 0.0
      %524 = vmatpush1.msra.mxu0 %v483
      %525 = vmatprep.subr.mxu0 0.0
      %526 = vmatpush1.msra.mxu0 %v484
      %527 = vmatprep.subr.mxu0 0.0
      %528 = vmatpush1.msra.mxu0 %v485
      %529 = vmatprep.subr.mxu0 0.0
      %530 = vmatpush1.msra.mxu0 %v486
      %531 = vmatprep.subr.mxu0 0.0
      %532 = vmatpush1.msra.mxu0 %v487
      %533 = vmatprep.subr.mxu0 0.0
      %534 = vmatpush1.msra.mxu0 %v488
      %535 = vmatprep.subr.mxu0 0.0
      %536 = vmatpush1.msra.mxu0 %v489
      %537 = vmatprep.subr.mxu0 0.0
      %538 = vmatpush1.msra.mxu0 %v490
      %539 = vmatprep.subr.mxu0 0.0
      %540 = vmatpush1.msra.mxu0 %v491
      %541 = vmatprep.subr.mxu0 0.0
      %542 = vmatpush1.msra.mxu0 %v492
      %543 = vmatprep.subr.mxu0 0.0
      %544 = vmatpush1.msra.mxu0 %v493
      %545 = vmatprep.subr.mxu0 0.0
      %546 = vmatpush1.msra.mxu0 %v494
      %547 = vmatprep.subr.mxu0 0.0
      %548 = vmatpush1.msra.mxu0 %v495
      %549 = vmatprep.subr.mxu0 0.0
      %550 = vmatpush1.msra.mxu0 %v496
      %551 = vmatprep.subr.mxu0 0.0
      %552 = vmatpush1.msra.mxu0 %v497
      %553 = vmatprep.subr.mxu0 0.0
      %554 = vmatpush1.msra.mxu0 %v498
      %555 = vmatprep.subr.mxu0 0.0
      %556 = vmatpush1.msra.mxu0 %v499
      %557 = vmatprep.subr.mxu0 0.0
      %558 = vmatpush1.msra.mxu0 %v500
      %559 = vmatprep.subr.mxu0 0.0
      %560 = vmatpush1.msra.mxu0 %v501
      %561 = vmatprep.subr.mxu0 0.0
      %562 = vmatpush1.msra.mxu0 %v502
      %563 = vmatprep.subr.mxu0 0.0
      %564 = vmatpush1.msra.mxu0 %v503
      %565 = vmatprep.subr.mxu0 0.0
      %566 = vmatpush1.msra.mxu0 %v504
      %567 = vmatprep.subr.mxu0 0.0
      %568 = vmatpush1.msra.mxu0 %v505
      %569 = vmatprep.subr.mxu0 0.0
      %570 = vmatpush1.msra.mxu0 %v506
      %571 = vmatprep.subr.mxu0 0.0
      %572 = vmatpush1.msra.mxu0 %v507
      %573 = vmatprep.subr.mxu0 0.0
      %574 = vmatpush1.msra.mxu0 %v508
      %575 = vmatprep.subr.mxu0 0.0
      %576 = vmatpush1.msra.mxu0 %v509
      %577 = vmatprep.subr.mxu0 0.0
      %578 = vmatpush1.msra.mxu0 %v510
      %579 = vmatprep.subr.mxu0 0.0
      %580 = vmatpush1.msra.mxu0 %v511
      %581 = vmatprep.subr.mxu0 0.0
      %582 = vmatpush1.msra.mxu0 %v512
      %583 = vmatprep.subr.mxu0 0.0
      %584 = vmatpush1.msra.mxu0 %v513
      %585 = vmatprep.mubr.f32.mxu0 %v377
      %586 = vmatmul.mubr.f32.gmra.mrb[0].mxu0 %v170
      %v587 = vpop.f32.mrb[0].mxu0
      %v588 = vadd.f32 %v519, %v587
      %v589 = vpop.f32.mrb[0].mxu0
      %590 = vmatprep.mubr.f32.mxu0 %v481
      %591 = vmatmul.mubr.f32.gmra.mrb[0].mxu0 %v273
      %v592 = vpop.f32.mrb[0].mxu0
      %v593 = vadd.f32 %v519, %v592
      %v594 = vpop.f32.mrb[0].mxu0
      %595 = vdwg.mxu0
      %v596 = vxor.u32 %v588, 2147483648
      %v597 = vxor.u32 %v593, 2147483648
      %v598 = vmul.f32 %v596, 1.442695
      %v599 = vpow.pop %v598
      %v600 = vmul.f32 %v597, 1.442695
      %v601 = vpow.pop %v600
      %v602 = vadd.f32 %v599, 1.0
      %v603 = vadd.f32 %v601, 1.0
      %v604 = vrcp.pop %v602
      %v605 = vmul.f32 1.0, %v604
      %v606 = vrcp.pop %v603
      %v607 = vmul.f32 1.0, %v606
      %v608 = vmul.f32 %v588, %v605
      %v609 = vmul.f32 %v593, %v607
      %610 = vst [vmem:[#allocation2] sm:$0xff] %v608
      %611 = vst [vmem:[#allocation2 + $0x8] sm:$0xff] %v609
    $region37: #{tpu_custom_call.1} parent=1 // pred_fallthru
      _
    %v612 = vld [vmem:[#allocation2] sm:$0xff]
    %v613 = vld [vmem:[#allocation2 + $0x8] sm:$0xff]
    %v614 = vld [vmem:[#allocation8] sm:$0xff]
    %v615 = vld [vmem:[#allocation8 + $0x8] sm:$0xff]
    %v616 = vld [vmem:[#allocation8 + $0x10] sm:$0xff]
    %v617 = vld [vmem:[#allocation8 + $0x18] sm:$0xff]
    %v618 = vld [vmem:[#allocation8 + $0x20] sm:$0xff]
    %v619 = vld [vmem:[#allocation8 + $0x28] sm:$0xff]
    %v620 = vld [vmem:[#allocation8 + $0x30] sm:$0xff]
    %v621 = vld [vmem:[#allocation8 + $0x38] sm:$0xff]
    %v622 = vld [vmem:[#allocation8 + $0x40] sm:$0xff]
    %v623 = vld [vmem:[#allocation8 + $0x48] sm:$0xff]
    %v624 = vld [vmem:[#allocation8 + $0x50] sm:$0xff]
    %v625 = vld [vmem:[#allocation8 + $0x58] sm:$0xff]
    %v626 = vld [vmem:[#allocation8 + $0x60] sm:$0xff]
    %v627 = vld [vmem:[#allocation8 + $0x68] sm:$0xff]
    %v628 = vld [vmem:[#allocation8 + $0x70] sm:$0xff]
    %v629 = vld [vmem:[#allocation8 + $0x78] sm:$0xff]
    %v630 = vld [vmem:[%s4] sm:$0x1]
    %v632 = vlaneseq
    %v633 = vshrl.u32 %v632, 7
    %v634 = vsub.s32 0, %v633
    %v635 = vrot.slane %v630, %v634
    %637 = vmatprep.subr.mxu0 0.0
    %638 = vmatpush1.msra.mxu0 %v614
    %639 = vmatprep.subr.mxu0 0.0
    %640 = vmatpush1.msra.mxu0 %v615
    %641 = vmatprep.subr.mxu0 0.0
    %642 = vmatpush1.msra.mxu0 %v616
    %643 = vmatprep.subr.mxu0 0.0
    %644 = vmatpush1.msra.mxu0 %v617
    %645 = vmatprep.subr.mxu0 0.0
    %646 = vmatpush1.msra.mxu0 %v618
    %647 = vmatprep.subr.mxu0 0.0
    %648 = vmatpush1.msra.mxu0 %v619
    %649 = vmatprep.subr.mxu0 0.0
    %650 = vmatpush1.msra.mxu0 %v620
    %651 = vmatprep.subr.mxu0 0.0
    %652 = vmatpush1.msra.mxu0 %v621
    %653 = vmatprep.subr.mxu0 0.0
    %654 = vmatpush1.msra.mxu0 %v622
    %655 = vmatprep.subr.mxu0 0.0
    %656 = vmatpush1.msra.mxu0 %v623
    %657 = vmatprep.subr.mxu0 0.0
    %658 = vmatpush1.msra.mxu0 %v624
    %659 = vmatprep.subr.mxu0 0.0
    %660 = vmatpush1.msra.mxu0 %v625
    %661 = vmatprep.subr.mxu0 0.0
    %662 = vmatpush1.msra.mxu0 %v626
    %663 = vmatprep.subr.mxu0 0.0
    %664 = vmatpush1.msra.mxu0 %v627
    %665 = vmatprep.subr.mxu0 0.0
    %666 = vmatpush1.msra.mxu0 %v628
    %667 = vmatprep.subr.mxu0 0.0
    %668 = vmatpush1.msra.mxu0 %v629
    %669 = vmatprep.subr.mxu0 0.0
    %670 = vmatpush1.msra.mxu0 0.0
    %671 = vmatprep.subr.mxu0 0.0
    %672 = vmatpush1.msra.mxu0 0.0
    %673 = vmatprep.subr.mxu0 0.0
    %674 = vmatpush1.msra.mxu0 0.0
    %675 = vmatprep.subr.mxu0 0.0
    %676 = vmatpush1.msra.mxu0 0.0
    %677 = vmatprep.subr.mxu0 0.0
    %678 = vmatpush1.msra.mxu0 0.0
    %679 = vmatprep.subr.mxu0 0.0
    %680 = vmatpush1.msra.mxu0 0.0
    %681 = vmatprep.subr.mxu0 0.0
    %682 = vmatpush1.msra.mxu0 0.0
    %683 = vmatprep.subr.mxu0 0.0
    %684 = vmatpush1.msra.mxu0 0.0
    %685 = vmatprep.subr.mxu0 0.0
    %686 = vmatpush1.msra.mxu0 0.0
    %687 = vmatprep.subr.mxu0 0.0
    %688 = vmatpush1.msra.mxu0 0.0
    %689 = vmatprep.subr.mxu0 0.0
    %690 = vmatpush1.msra.mxu0 0.0
    %691 = vmatprep.subr.mxu0 0.0
    %692 = vmatpush1.msra.mxu0 0.0
    %693 = vmatprep.subr.mxu0 0.0
    %694 = vmatpush1.msra.mxu0 0.0
    %695 = vmatprep.subr.mxu0 0.0
    %696 = vmatpush1.msra.mxu0 0.0
    %697 = vmatprep.subr.mxu0 0.0
    %698 = vmatpush1.msra.mxu0 0.0
    %699 = vmatprep.subr.mxu0 0.0
    %700 = vmatpush1.msra.mxu0 0.0
    %701 = vmatprep.mubr.f32.mxu0 0.0
    %702 = vmatmul.mubr.f32.gmra.mrb[0].mxu0 %v612
    %v703 = vpop.f32.mrb[0].mxu0
    %v704 = vadd.f32 %v635, %v703
    %v705 = vpop.f32.mrb[0].mxu0
    %706 = vmatprep.mubr.f32.mxu0 0.0
    %707 = vmatmul.mubr.f32.gmra.mrb[0].mxu0 %v613
    %v708 = vpop.f32.mrb[0].mxu0
    %v709 = vadd.f32 %v635, %v708
    %v710 = vpop.f32.mrb[0].mxu0
    %711 = vdwg.mxu0
    %712 = vst [vmem:[#allocation9] sm:$0xff] %v704
    %713 = vst [vmem:[#allocation9 + $0x8] sm:$0xff] %v709
    // Predicated region
    $region38: #{tpu_custom_call.1} parent=1 // pred_check
      _
    $region39: #{tpu_custom_call.1} parent=1 // pred_check_branch
      %715 = sbr.rel (0) target = $region41
    $region40: #{tpu_custom_call.1} parent=1 // pred_region
      %s717 = ssub.s32 256, 256
      %718 = vsyncadd [#allocation5], %s717
      %s719 = sshll.u32 [#allocation9], 4
      %s720 = int_to_ptr.vmem [resolvable:$true] %s719
      %725 = dma.vmem_to_hbm [thread:$0]  %s720, 256, %s5, [#allocation5], 128, 128, 8
    $region41: #{tpu_custom_call.1} parent=1 // pred_fallthru
      _
    // Predicated region
    $region42: #{tpu_custom_call.1} parent=1 // pred_check
      _
    $region43: #{tpu_custom_call.1} parent=1 // pred_check_branch
      %727 = sbr.rel (0) target = $region45
    $region44: #{tpu_custom_call.1} parent=1 // pred_region
      %728 = dma.done [#allocation5], 256
    $region45: #{tpu_custom_call.1} parent=1 // pred_fallthru
      _
    %729 = vsyncpa [#allocation4], 1
    %730 = vsyncpa [#allocation7], 1
    %731 = vsyncpa [#allocation5], 1

// kernel: tpu_custom_call.1
$region0: #{tpu_custom_call.1}
  #allocation0 [shape = 'u32[]', space=smem, size = 0x4, offset = 0x4, fixed_abs, tag = 'smem constant byte address 0x4 - core index']
  #allocation1 [shape = 'u32[144,128]{1,0:T(1,128)}', space=vmem, size = 0x12000, scoped, tag = 'internal scratch']
  #allocation2 [shape = 'f32[16,128]{1,0:T(8,128)}', space=vmem, size = 0x2000, scoped, tag = 'scratch operand']
  %s0 = inlined_call_operand.hbm [shape: f32[16,128], index: 0, kind: input, shape index: {}]
  %s1 = inlined_call_operand.hbm [shape: f32[256,128], index: 1, kind: input, shape index: {}]
  %s2 = inlined_call_operand.vmem [shape: f32[1,128], index: 2, kind: input, shape index: {}]
  %s3 = inlined_call_operand.hbm [shape: f32[128,128], index: 3, kind: input, shape index: {}]
  %s4 = inlined_call_operand.vmem [shape: f32[1,128], index: 4, kind: input, shape index: {}]
  %s5 = inlined_call_operand.hbm [shape: f32[16,128], index: 5, kind: output, shape index: {}]
  %s6 = sld [smem:[#allocation0]]
  $region46: #{tpu_custom_call.1} parent=0
    _
  %s8 = ssub.s32 1, %s6
  %s9 = scalar_select 0, %s8, %s6
  $region1: #{tpu_custom_call.1} parent=0
    #allocation3 [shape = 'u8[8192]{0}', space=vmem, size = 0x2000, scoped, tag = 'input window, operand 0, single buffered']
    #allocation4 [shape = 's32[1]{0}', space=sflag, size = 0x4, scoped, tag = 'scoped memory for tpu_custom_call.1']
    #allocation5 [shape = 's32[1]{0}', space=sflag, size = 0x4, scoped, tag = 'scoped memory for tpu_custom_call.1']
    #allocation6 [shape = 'u8[131072]{0}', space=vmem, size = 0x20000, scoped, tag = 'input window, operand 1, single buffered']
    #allocation7 [shape = 's32[1]{0}', space=sflag, size = 0x4, scoped, tag = 'scoped memory for tpu_custom_call.1']
    #allocation8 [shape = 'u8[65536]{0}', space=vmem, size = 0x10000, scoped, tag = 'input window, operand 3, single buffered']
    #allocation9 [shape = 'u8[8192]{0}', space=vmem, size = 0x2000, scoped, tag = 'output window, operand 0, single buffered']
    %10 = vsyncpa [#allocation4], 0
    %11 = vsyncpa [#allocation7], 0
    %12 = vsyncpa [#allocation5], 0
    // Predicated region
    $region2: #{tpu_custom_call.1} parent=1 // pred_check
      _
    $region3: #{tpu_custom_call.1} parent=1 // pred_check_branch
      %14 = sbr.rel (0) target = $region5
    $region4: #{tpu_custom_call.1} parent=1 // pred_region
      %s16 = ssub.s32 256, 256
      %17 = vsyncadd [#allocation4], %s16
      %s18 = sshll.u32 [#allocation3], 4
      %s19 = int_to_ptr.vmem [resolvable:$true] %s18
      %24 = dma.hbm_to_vmem [thread:$0]  %s0, 256, %s19, [#allocation4], 128, 128, 8
    $region5: #{tpu_custom_call.1} parent=1 // pred_fallthru
      _
    // Predicated region
    $region6: #{tpu_custom_call.1} parent=1 // pred_check
      _
    $region7: #{tpu_custom_call.1} parent=1 // pred_check_branch
      %26 = sbr.rel (0) target = $region9
    $region8: #{tpu_custom_call.1} parent=1 // pred_region
      %s28 = ssub.s32 4096, 4096
      %29 = vsyncadd [#allocation7], %s28
      %s30 = sshll.u32 [#allocation6], 4
      %s31 = int_to_ptr.vmem [resolvable:$true] %s30
      %36 = dma.hbm_to_vmem [thread:$0]  %s1, 4096, %s31, [#allocation7], 128, 128, 8
    $region9: #{tpu_custom_call.1} parent=1 // pred_fallthru
      _
    // Predicated region
    $region10: #{tpu_custom_call.1} parent=1 // pred_check
      _
    $region11: #{tpu_custom_call.1} parent=1 // pred_check_branch
      %38 = sbr.rel (0) target = $region13
    $region12: #{tpu_custom_call.1} parent=1 // pred_region
      _
    $region13: #{tpu_custom_call.1} parent=1 // pred_fallthru
      _
    // Predicated region
    $region14: #{tpu_custom_call.1} parent=1 // pred_check
      _
    $region15: #{tpu_custom_call.1} parent=1 // pred_check_branch
      %40 = sbr.rel (0) target = $region17
    $region16: #{tpu_custom_call.1} parent=1 // pred_region
      %s42 = ssub.s32 2048, 2048
      %43 = vsyncadd [#allocation7], %s42
      %s44 = sshll.u32 [#allocation8], 4
      %s45 = int_to_ptr.vmem [resolvable:$true] %s44
      %50 = dma.hbm_to_vmem [thread:$0]  %s3, 2048, %s45, [#allocation7], 128, 128, 8
    $region17: #{tpu_custom_call.1} parent=1 // pred_fallthru
      _
    // Predicated region
    $region18: #{tpu_custom_call.1} parent=1 // pred_check
      _
    $region19: #{tpu_custom_call.1} parent=1 // pred_check_branch
      %52 = sbr.rel (0) target = $region21
    $region20: #{tpu_custom_call.1} parent=1 // pred_region
      _
    $region21: #{tpu_custom_call.1} parent=1 // pred_fallthru
      _
    // Predicated region
    $region22: #{tpu_custom_call.1} parent=1 // pred_check
      _
    $region23: #{tpu_custom_call.1} parent=1 // pred_check_branch
      %54 = sbr.rel (0) target = $region25
    $region24: #{tpu_custom_call.1} parent=1 // pred_region
      %55 = dma.done [#allocation4], 256
    $region25: #{tpu_custom_call.1} parent=1 // pred_fallthru
      _
    // Predicated region
    $region26: #{tpu_custom_call.1} parent=1 // pred_check
      _
    $region27: #{tpu_custom_call.1} parent=1 // pred_check_branch
      %57 = sbr.rel (0) target = $region29
    $region28: #{tpu_custom_call.1} parent=1 // pred_region
      %58 = dma.done [#allocation7], 4096
    $region29: #{tpu_custom_call.1} parent=1 // pred_fallthru
      _
    // Predicated region
    $region30: #{tpu_custom_call.1} parent=1 // pred_check
      _
    $region31: #{tpu_custom_call.1} parent=1 // pred_check_branch
      %60 = sbr.rel (0) target = $region33
    $region32: #{tpu_custom_call.1} parent=1 // pred_region
      %61 = dma.done [#allocation7], 2048
    $region33: #{tpu_custom_call.1} parent=1 // pred_fallthru
      _
    %p62 = scmp.eq.s32.totalorder 0, 0
    // Predicated region
    $region34: #{tpu_custom_call.1} parent=1 // pred_check
      %p63 = pneg %p62
    $region35: #{tpu_custom_call.1} parent=1 // pred_check_branch
      %65 = sbr.rel (%p63) target = $region37
    $region36: #{tpu_custom_call.1} parent=1 // pred_region
      %v66 = vld [vmem:[#allocation3] sm:$0xff]
      %v67 = vld [vmem:[#allocation3 + $0x8] sm:$0xff]
      %v68 = vand.u32 2147483647, %v66
      %vm69 = vcmp.le.f32.partialorder %v68, 0.7853982
      %vm70 = vcmp.lt.s32.totalorder %v66, 0
      %v71 = vand.u32 %v66, 2139095040
      %v72 = vshrl.u32 %v71, 23
      %v73 = vsub.s32 %v72, 127
      %v74 = vand.u32 2147483647, %v66
      %v75 = vand.u32 %v74, 8388607
      %v76 = vor.u32 %v75, 8388608
      %v77 = vsub.s32 0, %v76
      %v78 = vadd.s32 %v73, 1
      %vm79 = vcmp.gt.s32.totalorder %v78, 0
      %v80 = vsel %vm79, %v78, 0
      %v81 = vshrl.u32 %v80, 5
      %v82 = vand.u32 %v80, 31
      %v83 = vsub.s32 32, %v82
      %v84 = vshrl.u32 683565275, %v83
      %v85 = vshll.u32 683565275, %v82
      %v86 = vshrl.u32 2475754826, %v83
      %v87 = vor.u32 %v85, %v86
      %v88 = vshll.u32 2475754826, %v82
      %v89 = vshrl.u32 2131351028, %v83
      %v90 = vor.u32 %v88, %v89
      %v91 = vshll.u32 2131351028, %v82
      %v92 = vshrl.u32 2102212464, %v83
      %v93 = vor.u32 %v91, %v92
      %v94 = vshll.u32 2102212464, %v82
      %v95 = vshrl.u32 920167782, %v83
      %v96 = vor.u32 %v94, %v95
      %v97 = vshll.u32 920167782, %v82
      %v98 = vshrl.u32 1326507024, %v83
      %v99 = vor.u32 %v97, %v98
      %vm100 = vcmp.lt.s32.totalorder %v81, 1
      %vm101 = vcmp.lt.s32.totalorder %v81, 2
      %vm102 = vcmp.lt.s32.totalorder %v81, 3
      %vm103 = vcmp.lt.s32.totalorder %v81, 4
      %v104 = vsel %vm100, %v84, %v87
      %v105 = vsel %vm103, %v93, 2102212464
      %v106 = vsel %vm102, %v90, %v105
      %v107 = vsel %vm101, %v104, %v106
      %v108 = vsel %vm100, %v87, %v90
      %v109 = vsel %vm103, %v96, 920167782
      %v110 = vsel %vm102, %v93, %v109
      %v111 = vsel %vm101, %v108, %v110
      %v112 = vsel %vm100, %v90, %v93
      %v113 = vsel %vm103, %v99, 1326507024
      %v114 = vsel %vm102, %v96, %v113
      %v115 = vsel %vm101, %v112, %v114
      %v116 = vshll.u32 %v76, 8
      %v117 = vmul.u32.u64.compose %v116, %v115
      %v118 = vextract.low.u32 %v117
      %v119 = vextract.high.u32 %v117
      %v120 = vmul.u32.u64.compose %v116, %v111
      %v121 = vextract.low.u32 %v120
      %v122 = vextract.high.u32 %v120
      %v123 = vmul.u32 %v116, %v107
      %v124 = vadd.s32 %v119, %v121
      %vm125 = vc.u32 %v119, %v121
      %v126 = vadd.s32 %v122, 1
      %v127 = vsel %vm125, %v126, %v122
      %v128 = vadd.s32 %v123, %v127
      %v129 = vadd.s32 %v128, 536870912
      %v130 = vshrl.u32 %v129, 30
      %v131 = vshll.u32 %v130, 30
      %v132 = vsub.s32 %v128, %v131
      %vm133 = vcmp.lt.s32.totalorder %v132, 0
      %v134 = vsub.s32 0, %v132
      %v135 = vsel %vm133, %v134, %v132
      %v136 = vclz %v135
      %v137 = vsub.s32 %v136, 2
      %vm138 = vcmp.gt.s32.totalorder 0, %v137
      %v139 = vsel %vm138, 0, %v137
      %v140 = vsub.s32 32, %v139
      %v141 = vshll.u32 %v132, %v139
      %v142 = vshrl.u32 %v124, %v140
      %v143 = vor.u32 %v141, %v142
      %v144 = vsub.s32 4294967266, %v139
      %v145 = vadd.s32 %v144, 127
      %v146 = vshll.u32 %v145, 23
      %v147 = vor.u32 4788187, %v146
      %v148 = vand.u32 2147483647, %v147
      %v150 = vcvt.s32.f32 %v143
      %v151 = vmul.f32 %v150, %v148
      %v152 = vxor.u32 %v151, 2147483648
      %v153 = vsel %vm70, %v152, %v151
      %v154 = vsub.s32 4, %v130
      %v155 = vsel %vm70, %v154, %v130
      %v156 = vsel %vm69, %v66, %v153
      %v157 = vsel %vm69, 0, %v155
      %v158 = vcosq.f32.pop %v156
      %v159 = vsinq.f32.pop %v156
      %vm160 = vweird.f32 %v66
      %v161 = vand.u32 %v157, 3
      %vm162 = vcmp.lt.s32.totalorder %v161, 2
      %vm163 = vcmp.eq.s32.totalorder %v161, 0
      %v164 = vxor.u32 %v159, 2147483648
      %v165 = vsel %vm163, %v158, %v164
      %vm166 = vcmp.eq.s32.totalorder %v161, 2
      %v167 = vxor.u32 %v158, 2147483648
      %v168 = vsel %vm166, %v167, %v159
      %v169 = vsel %vm162, %v165, %v168
      %v170 = vsel %vm160, nan, %v169
      %v171 = vand.u32 2147483647, %v67
      %vm172 = vcmp.le.f32.partialorder %v171, 0.7853982
      %vm173 = vcmp.lt.s32.totalorder %v67, 0
      %v174 = vand.u32 %v67, 2139095040
      %v175 = vshrl.u32 %v174, 23
      %v176 = vsub.s32 %v175, 127
      %v177 = vand.u32 2147483647, %v67
      %v178 = vand.u32 %v177, 8388607
      %v179 = vor.u32 %v178, 8388608
      %v180 = vsub.s32 0, %v179
      %v181 = vadd.s32 %v176, 1
      %vm182 = vcmp.gt.s32.totalorder %v181, 0
      %v183 = vsel %vm182, %v181, 0
      %v184 = vshrl.u32 %v183, 5
      %v185 = vand.u32 %v183, 31
      %v186 = vsub.s32 32, %v185
      %v187 = vshrl.u32 683565275, %v186
      %v188 = vshll.u32 683565275, %v185
      %v189 = vshrl.u32 2475754826, %v186
      %v190 = vor.u32 %v188, %v189
      %v191 = vshll.u32 2475754826, %v185
      %v192 = vshrl.u32 2131351028, %v186
      %v193 = vor.u32 %v191, %v192
      %v194 = vshll.u32 2131351028, %v185
      %v195 = vshrl.u32 2102212464, %v186
      %v196 = vor.u32 %v194, %v195
      %v197 = vshll.u32 2102212464, %v185
      %v198 = vshrl.u32 920167782, %v186
      %v199 = vor.u32 %v197, %v198
      %v200 = vshll.u32 920167782, %v185
      %v201 = vshrl.u32 1326507024, %v186
      %v202 = vor.u32 %v200, %v201
      %vm203 = vcmp.lt.s32.totalorder %v184, 1
      %vm204 = vcmp.lt.s32.totalorder %v184, 2
      %vm205 = vcmp.lt.s32.totalorder %v184, 3
      %vm206 = vcmp.lt.s32.totalorder %v184, 4
      %v207 = vsel %vm203, %v187, %v190
      %v208 = vsel %vm206, %v196, 2102212464
      %v209 = vsel %vm205, %v193, %v208
      %v210 = vsel %vm204, %v207, %v209
      %v211 = vsel %vm203, %v190, %v193
      %v212 = vsel %vm206, %v199, 920167782
      %v213 = vsel %vm205, %v196, %v212
      %v214 = vsel %vm204, %v211, %v213
      %v215 = vsel %vm203, %v193, %v196
      %v216 = vsel %vm206, %v202, 1326507024
      %v217 = vsel %vm205, %v199, %v216
      %v218 = vsel %vm204, %v215, %v217
      %v219 = vshll.u32 %v179, 8
      %v220 = vmul.u32.u64.compose %v219, %v218
      %v221 = vextract.low.u32 %v220
      %v222 = vextract.high.u32 %v220
      %v223 = vmul.u32.u64.compose %v219, %v214
      %v224 = vextract.low.u32 %v223
      %v225 = vextract.high.u32 %v223
      %v226 = vmul.u32 %v219, %v210
      %v227 = vadd.s32 %v222, %v224
      %vm228 = vc.u32 %v222, %v224
      %v229 = vadd.s32 %v225, 1
      %v230 = vsel %vm228, %v229, %v225
      %v231 = vadd.s32 %v226, %v230
      %v232 = vadd.s32 %v231, 536870912
      %v233 = vshrl.u32 %v232, 30
      %v234 = vshll.u32 %v233, 30
      %v235 = vsub.s32 %v231, %v234
      %vm236 = vcmp.lt.s32.totalorder %v235, 0
      %v237 = vsub.s32 0, %v235
      %v238 = vsel %vm236, %v237, %v235
      %v239 = vclz %v238
      %v240 = vsub.s32 %v239, 2
      %vm241 = vcmp.gt.s32.totalorder 0, %v240
      %v242 = vsel %vm241, 0, %v240
      %v243 = vsub.s32 32, %v242
      %v244 = vshll.u32 %v235, %v242
      %v245 = vshrl.u32 %v227, %v243
      %v246 = vor.u32 %v244, %v245
      %v247 = vsub.s32 4294967266, %v242
      %v248 = vadd.s32 %v247, 127
      %v249 = vshll.u32 %v248, 23
      %v250 = vor.u32 4788187, %v249
      %v251 = vand.u32 2147483647, %v250
      %v253 = vcvt.s32.f32 %v246
      %v254 = vmul.f32 %v253, %v251
      %v255 = vxor.u32 %v254, 2147483648
      %v256 = vsel %vm173, %v255, %v254
      %v257 = vsub.s32 4, %v233
      %v258 = vsel %vm173, %v257, %v233
      %v259 = vsel %vm172, %v67, %v256
      %v260 = vsel %vm172, 0, %v258
      %v261 = vcosq.f32.pop %v259
      %v262 = vsinq.f32.pop %v259
      %vm263 = vweird.f32 %v67
      %v264 = vand.u32 %v260, 3
      %vm265 = vcmp.lt.s32.totalorder %v264, 2
      %vm266 = vcmp.eq.s32.totalorder %v264, 0
      %v267 = vxor.u32 %v262, 2147483648
      %v268 = vsel %vm266, %v261, %v267
      %vm269 = vcmp.eq.s32.totalorder %v264, 2
      %v270 = vxor.u32 %v261, 2147483648
      %v271 = vsel %vm269, %v270, %v262
      %v272 = vsel %vm265, %v268, %v271
      %v273 = vsel %vm263, nan, %v272
      %v274 = vand.u32 2147483647, %v66
      %vm275 = vcmp.le.f32.partialorder %v274, 0.7853982
      %vm276 = vcmp.lt.s32.totalorder %v66, 0
      %v277 = vand.u32 %v66, 2139095040
      %v278 = vshrl.u32 %v277, 23
      %v279 = vsub.s32 %v278, 127
      %v280 = vand.u32 2147483647, %v66
      %v281 = vand.u32 %v280, 8388607
      %v282 = vor.u32 %v281, 8388608
      %v283 = vsub.s32 0, %v282
      %v284 = vadd.s32 %v279, 1
      %vm285 = vcmp.gt.s32.totalorder %v284, 0
      %v286 = vsel %vm285, %v284, 0
      %v287 = vshrl.u32 %v286, 5
      %v288 = vand.u32 %v286, 31
      %v289 = vsub.s32 32, %v288
      %v290 = vshrl.u32 683565275, %v289
      %v291 = vshll.u32 683565275, %v288
      %v292 = vshrl.u32 2475754826, %v289
      %v293 = vor.u32 %v291, %v292
      %v294 = vshll.u32 2475754826, %v288
      %v295 = vshrl.u32 2131351028, %v289
      %v296 = vor.u32 %v294, %v295
      %v297 = vshll.u32 2131351028, %v288
      %v298 = vshrl.u32 2102212464, %v289
      %v299 = vor.u32 %v297, %v298
      %v300 = vshll.u32 2102212464, %v288
      %v301 = vshrl.u32 920167782, %v289
      %v302 = vor.u32 %v300, %v301
      %v303 = vshll.u32 920167782, %v288
      %v304 = vshrl.u32 1326507024, %v289
      %v305 = vor.u32 %v303, %v304
      %vm306 = vcmp.lt.s32.totalorder %v287, 1
      %vm307 = vcmp.lt.s32.totalorder %v287, 2
      %vm308 = vcmp.lt.s32.totalorder %v287, 3
      %vm309 = vcmp.lt.s32.totalorder %v287, 4
      %v310 = vsel %vm306, %v290, %v293
      %v311 = vsel %vm309, %v299, 2102212464
      %v312 = vsel %vm308, %v296, %v311
      %v313 = vsel %vm307, %v310, %v312
      %v314 = vsel %vm306, %v293, %v296
      %v315 = vsel %vm309, %v302, 920167782
      %v316 = vsel %vm308, %v299, %v315
      %v317 = vsel %vm307, %v314, %v316
      %v318 = vsel %vm306, %v296, %v299
      %v319 = vsel %vm309, %v305, 1326507024
      %v320 = vsel %vm308, %v302, %v319
      %v321 = vsel %vm307, %v318, %v320
      %v322 = vshll.u32 %v282, 8
      %v323 = vmul.u32.u64.compose %v322, %v321
      %v324 = vextract.low.u32 %v323
      %v325 = vextract.high.u32 %v323
      %v326 = vmul.u32.u64.compose %v322, %v317
      %v327 = vextract.low.u32 %v326
      %v328 = vextract.high.u32 %v326
      %v329 = vmul.u32 %v322, %v313
      %v330 = vadd.s32 %v325, %v327
      %vm331 = vc.u32 %v325, %v327
      %v332 = vadd.s32 %v328, 1
      %v333 = vsel %vm331, %v332, %v328
      %v334 = vadd.s32 %v329, %v333
      %v335 = vadd.s32 %v334, 536870912
      %v336 = vshrl.u32 %v335, 30
      %v337 = vshll.u32 %v336, 30
      %v338 = vsub.s32 %v334, %v337
      %vm339 = vcmp.lt.s32.totalorder %v338, 0
      %v340 = vsub.s32 0, %v338
      %v341 = vsel %vm339, %v340, %v338
      %v342 = vclz %v341
      %v343 = vsub.s32 %v342, 2
      %vm344 = vcmp.gt.s32.totalorder 0, %v343
      %v345 = vsel %vm344, 0, %v343
      %v346 = vsub.s32 32, %v345
      %v347 = vshll.u32 %v338, %v345
      %v348 = vshrl.u32 %v330, %v346
      %v349 = vor.u32 %v347, %v348
      %v350 = vsub.s32 4294967266, %v345
      %v351 = vadd.s32 %v350, 127
      %v352 = vshll.u32 %v351, 23
      %v353 = vor.u32 4788187, %v352
      %v354 = vand.u32 2147483647, %v353
      %v356 = vcvt.s32.f32 %v349
      %v357 = vmul.f32 %v356, %v354
      %v358 = vxor.u32 %v357, 2147483648
      %v359 = vsel %vm276, %v358, %v357
      %v360 = vsub.s32 4, %v336
      %v361 = vsel %vm276, %v360, %v336
      %v362 = vsel %vm275, %v66, %v359
      %v363 = vsel %vm275, 0, %v361
      %v364 = vcosq.f32.pop %v362
      %v365 = vsinq.f32.pop %v362
      %vm366 = vweird.f32 %v66
      %v367 = vadd.s32 %v363, 3
      %v368 = vand.u32 %v367, 3
      %vm369 = vcmp.lt.s32.totalorder %v368, 2
      %vm370 = vcmp.eq.s32.totalorder %v368, 0
      %v371 = vxor.u32 %v365, 2147483648
      %v372 = vsel %vm370, %v364, %v371
      %vm373 = vcmp.eq.s32.totalorder %v368, 2
      %v374 = vxor.u32 %v364, 2147483648
      %v375 = vsel %vm373, %v374, %v365
      %v376 = vsel %vm369, %v372, %v375
      %v377 = vsel %vm366, nan, %v376
      %v378 = vand.u32 2147483647, %v67
      %vm379 = vcmp.le.f32.partialorder %v378, 0.7853982
      %vm380 = vcmp.lt.s32.totalorder %v67, 0
      %v381 = vand.u32 %v67, 2139095040
      %v382 = vshrl.u32 %v381, 23
      %v383 = vsub.s32 %v382, 127
      %v384 = vand.u32 2147483647, %v67
      %v385 = vand.u32 %v384, 8388607
      %v386 = vor.u32 %v385, 8388608
      %v387 = vsub.s32 0, %v386
      %v388 = vadd.s32 %v383, 1
      %vm389 = vcmp.gt.s32.totalorder %v388, 0
      %v390 = vsel %vm389, %v388, 0
      %v391 = vshrl.u32 %v390, 5
      %v392 = vand.u32 %v390, 31
      %v393 = vsub.s32 32, %v392
      %v394 = vshrl.u32 683565275, %v393
      %v395 = vshll.u32 683565275, %v392
      %v396 = vshrl.u32 2475754826, %v393
      %v397 = vor.u32 %v395, %v396
      %v398 = vshll.u32 2475754826, %v392
      %v399 = vshrl.u32 2131351028, %v393
      %v400 = vor.u32 %v398, %v399
      %v401 = vshll.u32 2131351028, %v392
      %v402 = vshrl.u32 2102212464, %v393
      %v403 = vor.u32 %v401, %v402
      %v404 = vshll.u32 2102212464, %v392
      %v405 = vshrl.u32 920167782, %v393
      %v406 = vor.u32 %v404, %v405
      %v407 = vshll.u32 920167782, %v392
      %v408 = vshrl.u32 1326507024, %v393
      %v409 = vor.u32 %v407, %v408
      %vm410 = vcmp.lt.s32.totalorder %v391, 1
      %vm411 = vcmp.lt.s32.totalorder %v391, 2
      %vm412 = vcmp.lt.s32.totalorder %v391, 3
      %vm413 = vcmp.lt.s32.totalorder %v391, 4
      %v414 = vsel %vm410, %v394, %v397
      %v415 = vsel %vm413, %v403, 2102212464
      %v416 = vsel %vm412, %v400, %v415
      %v417 = vsel %vm411, %v414, %v416
      %v418 = vsel %vm410, %v397, %v400
      %v419 = vsel %vm413, %v406, 920167782
      %v420 = vsel %vm412, %v403, %v419
      %v421 = vsel %vm411, %v418, %v420
      %v422 = vsel %vm410, %v400, %v403
      %v423 = vsel %vm413, %v409, 1326507024
      %v424 = vsel %vm412, %v406, %v423
      %v425 = vsel %vm411, %v422, %v424
      %v426 = vshll.u32 %v386, 8
      %v427 = vmul.u32.u64.compose %v426, %v425
      %v428 = vextract.low.u32 %v427
      %v429 = vextract.high.u32 %v427
      %v430 = vmul.u32.u64.compose %v426, %v421
      %v431 = vextract.low.u32 %v430
      %v432 = vextract.high.u32 %v430
      %v433 = vmul.u32 %v426, %v417
      %v434 = vadd.s32 %v429, %v431
      %vm435 = vc.u32 %v429, %v431
      %v436 = vadd.s32 %v432, 1
      %v437 = vsel %vm435, %v436, %v432
      %v438 = vadd.s32 %v433, %v437
      %v439 = vadd.s32 %v438, 536870912
      %v440 = vshrl.u32 %v439, 30
      %v441 = vshll.u32 %v440, 30
      %v442 = vsub.s32 %v438, %v441
      %vm443 = vcmp.lt.s32.totalorder %v442, 0
      %v444 = vsub.s32 0, %v442
      %v445 = vsel %vm443, %v444, %v442
      %v446 = vclz %v445
      %v447 = vsub.s32 %v446, 2
      %vm448 = vcmp.gt.s32.totalorder 0, %v447
      %v449 = vsel %vm448, 0, %v447
      %v450 = vsub.s32 32, %v449
      %v451 = vshll.u32 %v442, %v449
      %v452 = vshrl.u32 %v434, %v450
      %v453 = vor.u32 %v451, %v452
      %v454 = vsub.s32 4294967266, %v449
      %v455 = vadd.s32 %v454, 127
      %v456 = vshll.u32 %v455, 23
      %v457 = vor.u32 4788187, %v456
      %v458 = vand.u32 2147483647, %v457
      %v460 = vcvt.s32.f32 %v453
      %v461 = vmul.f32 %v460, %v458
      %v462 = vxor.u32 %v461, 2147483648
      %v463 = vsel %vm380, %v462, %v461
      %v464 = vsub.s32 4, %v440
      %v465 = vsel %vm380, %v464, %v440
      %v466 = vsel %vm379, %v67, %v463
      %v467 = vsel %vm379, 0, %v465
      %v468 = vcosq.f32.pop %v466
      %v469 = vsinq.f32.pop %v466
      %vm470 = vweird.f32 %v67
      %v471 = vadd.s32 %v467, 3
      %v472 = vand.u32 %v471, 3
      %vm473 = vcmp.lt.s32.totalorder %v472, 2
      %vm474 = vcmp.eq.s32.totalorder %v472, 0
      %v475 = vxor.u32 %v469, 2147483648
      %v476 = vsel %vm474, %v468, %v475
      %vm477 = vcmp.eq.s32.totalorder %v472, 2
      %v478 = vxor.u32 %v468, 2147483648
      %v479 = vsel %vm477, %v478, %v469
      %v480 = vsel %vm473, %v476, %v479
      %v481 = vsel %vm470, nan, %v480
      %v482 = vld [vmem:[#allocation6] sm:$0xff]
      %v483 = vld [vmem:[#allocation6 + $0x8] sm:$0xff]
      %v484 = vld [vmem:[#allocation6 + $0x10] sm:$0xff]
      %v485 = vld [vmem:[#allocation6 + $0x18] sm:$0xff]
      %v486 = vld [vmem:[#allocation6 + $0x20] sm:$0xff]
      %v487 = vld [vmem:[#allocation6 + $0x28] sm:$0xff]
      %v488 = vld [vmem:[#allocation6 + $0x30] sm:$0xff]
      %v489 = vld [vmem:[#allocation6 + $0x38] sm:$0xff]
      %v490 = vld [vmem:[#allocation6 + $0x40] sm:$0xff]
      %v491 = vld [vmem:[#allocation6 + $0x48] sm:$0xff]
      %v492 = vld [vmem:[#allocation6 + $0x50] sm:$0xff]
      %v493 = vld [vmem:[#allocation6 + $0x58] sm:$0xff]
      %v494 = vld [vmem:[#allocation6 + $0x60] sm:$0xff]
      %v495 = vld [vmem:[#allocation6 + $0x68] sm:$0xff]
      %v496 = vld [vmem:[#allocation6 + $0x70] sm:$0xff]
      %v497 = vld [vmem:[#allocation6 + $0x78] sm:$0xff]
      %v498 = vld [vmem:[#allocation6 + $0x80] sm:$0xff]
      %v499 = vld [vmem:[#allocation6 + $0x88] sm:$0xff]
      %v500 = vld [vmem:[#allocation6 + $0x90] sm:$0xff]
      %v501 = vld [vmem:[#allocation6 + $0x98] sm:$0xff]
      %v502 = vld [vmem:[#allocation6 + $0xa0] sm:$0xff]
      %v503 = vld [vmem:[#allocation6 + $0xa8] sm:$0xff]
      %v504 = vld [vmem:[#allocation6 + $0xb0] sm:$0xff]
      %v505 = vld [vmem:[#allocation6 + $0xb8] sm:$0xff]
      %v506 = vld [vmem:[#allocation6 + $0xc0] sm:$0xff]
      %v507 = vld [vmem:[#allocation6 + $0xc8] sm:$0xff]
      %v508 = vld [vmem:[#allocation6 + $0xd0] sm:$0xff]
      %v509 = vld [vmem:[#allocation6 + $0xd8] sm:$0xff]
      %v510 = vld [vmem:[#allocation6 + $0xe0] sm:$0xff]
      %v511 = vld [vmem:[#allocation6 + $0xe8] sm:$0xff]
      %v512 = vld [vmem:[#allocation6 + $0xf0] sm:$0xff]
      %v513 = vld [vmem:[#allocation6 + $0xf8] sm:$0xff]
      %v514 = vld [vmem:[%s2] sm:$0x1]
      %v516 = vlaneseq
      %v517 = vshrl.u32 %v516, 7
      %v518 = vsub.s32 0, %v517
      %v519 = vrot.slane %v514, %v518
      %521 = vmatprep.subr.mxu0 0.0
      %522 = vmatpush1.msra.mxu0 %v482
      %523 = vmatprep.subr.mxu0 0.0
      %524 = vmatpush1.msra.mxu0 %v483
      %525 = vmatprep.subr.mxu0 0.0
      %526 = vmatpush1.msra.mxu0 %v484
      %527 = vmatprep.subr.mxu0 0.0
      %528 = vmatpush1.msra.mxu0 %v485
      %529 = vmatprep.subr.mxu0 0.0
      %530 = vmatpush1.msra.mxu0 %v486
      %531 = vmatprep.subr.mxu0 0.0
      %532 = vmatpush1.msra.mxu0 %v487
      %533 = vmatprep.subr.mxu0 0.0
      %534 = vmatpush1.msra.mxu0 %v488
      %535 = vmatprep.subr.mxu0 0.0
      %536 = vmatpush1.msra.mxu0 %v489
      %537 = vmatprep.subr.mxu0 0.0
      %538 = vmatpush1.msra.mxu0 %v490
      %539 = vmatprep.subr.mxu0 0.0
      %540 = vmatpush1.msra.mxu0 %v491
      %541 = vmatprep.subr.mxu0 0.0
      %542 = vmatpush1.msra.mxu0 %v492
      %543 = vmatprep.subr.mxu0 0.0
      %544 = vmatpush1.msra.mxu0 %v493
      %545 = vmatprep.subr.mxu0 0.0
      %546 = vmatpush1.msra.mxu0 %v494
      %547 = vmatprep.subr.mxu0 0.0
      %548 = vmatpush1.msra.mxu0 %v495
      %549 = vmatprep.subr.mxu0 0.0
      %550 = vmatpush1.msra.mxu0 %v496
      %551 = vmatprep.subr.mxu0 0.0
      %552 = vmatpush1.msra.mxu0 %v497
      %553 = vmatprep.subr.mxu0 0.0
      %554 = vmatpush1.msra.mxu0 %v498
      %555 = vmatprep.subr.mxu0 0.0
      %556 = vmatpush1.msra.mxu0 %v499
      %557 = vmatprep.subr.mxu0 0.0
      %558 = vmatpush1.msra.mxu0 %v500
      %559 = vmatprep.subr.mxu0 0.0
      %560 = vmatpush1.msra.mxu0 %v501
      %561 = vmatprep.subr.mxu0 0.0
      %562 = vmatpush1.msra.mxu0 %v502
      %563 = vmatprep.subr.mxu0 0.0
      %564 = vmatpush1.msra.mxu0 %v503
      %565 = vmatprep.subr.mxu0 0.0
      %566 = vmatpush1.msra.mxu0 %v504
      %567 = vmatprep.subr.mxu0 0.0
      %568 = vmatpush1.msra.mxu0 %v505
      %569 = vmatprep.subr.mxu0 0.0
      %570 = vmatpush1.msra.mxu0 %v506
      %571 = vmatprep.subr.mxu0 0.0
      %572 = vmatpush1.msra.mxu0 %v507
      %573 = vmatprep.subr.mxu0 0.0
      %574 = vmatpush1.msra.mxu0 %v508
      %575 = vmatprep.subr.mxu0 0.0
      %576 = vmatpush1.msra.mxu0 %v509
      %577 = vmatprep.subr.mxu0 0.0
      %578 = vmatpush1.msra.mxu0 %v510
      %579 = vmatprep.subr.mxu0 0.0
      %580 = vmatpush1.msra.mxu0 %v511
      %581 = vmatprep.subr.mxu0 0.0
      %582 = vmatpush1.msra.mxu0 %v512
      %583 = vmatprep.subr.mxu0 0.0
      %584 = vmatpush1.msra.mxu0 %v513
      %585 = vmatprep.mubr.f32.mxu0 %v377
      %586 = vmatmul.mubr.f32.gmra.mrb[0].mxu0 %v170
      %v587 = vpop.f32.mrb[0].mxu0
      %v588 = vadd.f32 %v519, %v587
      %v589 = vpop.f32.mrb[0].mxu0
      %590 = vmatprep.mubr.f32.mxu0 %v481
      %591 = vmatmul.mubr.f32.gmra.mrb[0].mxu0 %v273
      %v592 = vpop.f32.mrb[0].mxu0
      %v593 = vadd.f32 %v519, %v592
      %v594 = vpop.f32.mrb[0].mxu0
      %595 = vdwg.mxu0
      %v596 = vxor.u32 %v588, 2147483648
      %v597 = vxor.u32 %v593, 2147483648
      %v598 = vmul.f32 %v596, 1.442695
      %v599 = vpow.pop %v598
      %v600 = vmul.f32 %v597, 1.442695
      %v601 = vpow.pop %v600
      %v602 = vadd.f32 %v599, 1.0
      %v603 = vadd.f32 %v601, 1.0
      %v604 = vrcp.pop %v602
      %v605 = vmul.f32 1.0, %v604
      %v606 = vrcp.pop %v603
      %v607 = vmul.f32 1.0, %v606
      %v608 = vmul.f32 %v588, %v605
      %v609 = vmul.f32 %v593, %v607
      %610 = vst [vmem:[#allocation2] sm:$0xff] %v608
      %611 = vst [vmem:[#allocation2 + $0x8] sm:$0xff] %v609
    $region37: #{tpu_custom_call.1} parent=1 // pred_fallthru
      _
    %v612 = vld [vmem:[#allocation2] sm:$0xff]
    %v613 = vld [vmem:[#allocation2 + $0x8] sm:$0xff]
    %v614 = vld [vmem:[#allocation8] sm:$0xff]
    %v615 = vld [vmem:[#allocation8 + $0x8] sm:$0xff]
    %v616 = vld [vmem:[#allocation8 + $0x10] sm:$0xff]
    %v617 = vld [vmem:[#allocation8 + $0x18] sm:$0xff]
    %v618 = vld [vmem:[#allocation8 + $0x20] sm:$0xff]
    %v619 = vld [vmem:[#allocation8 + $0x28] sm:$0xff]
    %v620 = vld [vmem:[#allocation8 + $0x30] sm:$0xff]
    %v621 = vld [vmem:[#allocation8 + $0x38] sm:$0xff]
    %v622 = vld [vmem:[#allocation8 + $0x40] sm:$0xff]
    %v623 = vld [vmem:[#allocation8 + $0x48] sm:$0xff]
    %v624 = vld [vmem:[#allocation8 + $0x50] sm:$0xff]
    %v625 = vld [vmem:[#allocation8 + $0x58] sm:$0xff]
    %v626 = vld [vmem:[#allocation8 + $0x60] sm:$0xff]
    %v627 = vld [vmem:[#allocation8 + $0x68] sm:$0xff]
    %v628 = vld [vmem:[#allocation8 + $0x70] sm:$0xff]
    %v629 = vld [vmem:[#allocation8 + $0x78] sm:$0xff]
    %v630 = vld [vmem:[%s4] sm:$0x1]
    %v632 = vlaneseq
    %v633 = vshrl.u32 %v632, 7
    %v634 = vsub.s32 0, %v633
    %v635 = vrot.slane %v630, %v634
    %637 = vmatprep.subr.mxu0 0.0
    %638 = vmatpush1.msra.mxu0 %v614
    %639 = vmatprep.subr.mxu0 0.0
    %640 = vmatpush1.msra.mxu0 %v615
    %641 = vmatprep.subr.mxu0 0.0
    %642 = vmatpush1.msra.mxu0 %v616
    %643 = vmatprep.subr.mxu0 0.0
    %644 = vmatpush1.msra.mxu0 %v617
    %645 = vmatprep.subr.mxu0 0.0
    %646 = vmatpush1.msra.mxu0 %v618
    %647 = vmatprep.subr.mxu0 0.0
    %648 = vmatpush1.msra.mxu0 %v619
    %649 = vmatprep.subr.mxu0 0.0
    %650 = vmatpush1.msra.mxu0 %v620
    %651 = vmatprep.subr.mxu0 0.0
    %652 = vmatpush1.msra.mxu0 %v621
    %653 = vmatprep.subr.mxu0 0.0
    %654 = vmatpush1.msra.mxu0 %v622
    %655 = vmatprep.subr.mxu0 0.0
    %656 = vmatpush1.msra.mxu0 %v623
    %657 = vmatprep.subr.mxu0 0.0
    %658 = vmatpush1.msra.mxu0 %v624
    %659 = vmatprep.subr.mxu0 0.0
    %660 = vmatpush1.msra.mxu0 %v625
    %661 = vmatprep.subr.mxu0 0.0
    %662 = vmatpush1.msra.mxu0 %v626
    %663 = vmatprep.subr.mxu0 0.0
    %664 = vmatpush1.msra.mxu0 %v627
    %665 = vmatprep.subr.mxu0 0.0
    %666 = vmatpush1.msra.mxu0 %v628
    %667 = vmatprep.subr.mxu0 0.0
    %668 = vmatpush1.msra.mxu0 %v629
    %669 = vmatprep.subr.mxu0 0.0
    %670 = vmatpush1.msra.mxu0 0.0
    %671 = vmatprep.subr.mxu0 0.0
    %672 = vmatpush1.msra.mxu0 0.0
    %673 = vmatprep.subr.mxu0 0.0
    %674 = vmatpush1.msra.mxu0 0.0
    %675 = vmatprep.subr.mxu0 0.0
    %676 = vmatpush1.msra.mxu0 0.0
    %677 = vmatprep.subr.mxu0 0.0
    %678 = vmatpush1.msra.mxu0 0.0
    %679 = vmatprep.subr.mxu0 0.0
    %680 = vmatpush1.msra.mxu0 0.0
    %681 = vmatprep.subr.mxu0 0.0
    %682 = vmatpush1.msra.mxu0 0.0
    %683 = vmatprep.subr.mxu0 0.0
    %684 = vmatpush1.msra.mxu0 0.0
    %685 = vmatprep.subr.mxu0 0.0
    %686 = vmatpush1.msra.mxu0 0.0
    %687 = vmatprep.subr.mxu0 0.0
    %688 = vmatpush1.msra.mxu0 0.0
    %689 = vmatprep.subr.mxu0 0.0
    %690 = vmatpush1.msra.mxu0 0.0
    %691 = vmatprep.subr.mxu0 0.0
    %692 = vmatpush1.msra.mxu0 0.0
    %693 = vmatprep.subr.mxu0 0.0
    %694 = vmatpush1.msra.mxu0 0.0
    %695 = vmatprep.subr.mxu0 0.0
    %696 = vmatpush1.msra.mxu0 0.0
    %697 = vmatprep.subr.mxu0 0.0
    %698 = vmatpush1.msra.mxu0 0.0
    %699 = vmatprep.subr.mxu0 0.0
    %700 = vmatpush1.msra.mxu0 0.0
    %701 = vmatprep.mubr.f32.mxu0 0.0
    %702 = vmatmul.mubr.f32.gmra.mrb[0].mxu0 %v612
    %v703 = vpop.f32.mrb[0].mxu0
    %v704 = vadd.f32 %v635, %v703
    %v705 = vpop.f32.mrb[0].mxu0
    %706 = vmatprep.mubr.f32.mxu0 0.0
    %707 = vmatmul.mubr.f32.gmra.mrb[0].mxu0 %v613
    %v708 = vpop.f32.mrb[0].mxu0
    %v709 = vadd.f32 %v635, %v708
    %v710 = vpop.f32.mrb[0].mxu0
    %711 = vdwg.mxu0
    %712 = vst [vmem:[#allocation9] sm:$0xff] %v704
    %713 = vst [vmem:[#allocation9 + $0x8] sm:$0xff] %v709
    // Predicated region
    $region38: #{tpu_custom_call.1} parent=1 // pred_check
      _
    $region39: #{tpu_custom_call.1} parent=1 // pred_check_branch
      %715 = sbr.rel (0) target = $region41
    $region40: #{tpu_custom_call.1} parent=1 // pred_region
      %s717 = ssub.s32 256, 256
      %718 = vsyncadd [#allocation5], %s717
      %s719 = sshll.u32 [#allocation9], 4
      %s720 = int_to_ptr.vmem [resolvable:$true] %s719
      %725 = dma.vmem_to_hbm [thread:$0]  %s720, 256, %s5, [#allocation5], 128, 128, 8
    $region41: #{tpu_custom_call.1} parent=1 // pred_fallthru
      _
    // Predicated region
    $region42: #{tpu_custom_call.1} parent=1 // pred_check
      _
    $region43: #{tpu_custom_call.1} parent=1 // pred_check_branch
      %727 = sbr.rel (0) target = $region45
    $region44: #{tpu_custom_call.1} parent=1 // pred_region
      %728 = dma.done [#allocation5], 256
    $region45: #{tpu_custom_call.1} parent=1 // pred_fallthru
      _
    %729 = vsyncpa [#allocation4], 1
    %730 = vsyncpa [#allocation7], 1
    %731 = vsyncpa [#allocation5], 1

</llo_original>
